<compile_context>
chip_gen: v7x
topology: tpu7x:2x2x1
jax: 0.10.0
libtpu: 0.0.40
codegen_flags: <defaults>
</compile_context>

<pallas_src>
import functools

import jax
import jax.numpy as jnp
from jax.experimental import pallas as pl
from jax.experimental.pallas import tpu as pltpu  # noqa: F401  (memory spaces available if needed)


LANE = 128
NUM_VIEWS = 3


def _round_up(x, m):
    return ((x + m - 1) // m) * m


def _sigmoid(y):
    # Exact sigmoid via tanh: one EUP op + a VPU fma (instead of exp + recip).
    return 0.5 * jnp.tanh(0.5 * y) + 0.5


# ----------------------------------------------------------------------------
# Fused kernel: all three views' enc1 -> enc2 -> coef@z (pre & post) -> dec1
# -> dec2 chains, statically unrolled in a single grid step.
# Inputs are lane-padded to P=128; weights are (in, out) bf16; biases f32.
# ----------------------------------------------------------------------------
def _view_chain_kernel(x_ref, w1_ref, b1_ref, w2_ref, b2_ref,
                       w3_ref, b3_ref, w4_ref, b4_ref, coef_ref,
                       lat_pre_ref, lat_ref, zc_pre_ref, zc_ref, recon_ref):
    for v in range(NUM_VIEWS):                      # static unroll: 3 independent chains
        x = x_ref[v].astype(jnp.bfloat16)           # (n, P)

        # encoder layer 1 (matmul bf16 -> f32 acc; bias + sigmoid in f32)
        y1 = jnp.dot(x, w1_ref[v], preferred_element_type=jnp.float32)
        h1 = _sigmoid(y1 + b1_ref[v])
        lat_pre_ref[v] = h1

        # encoder layer 2
        y2 = jnp.dot(h1.astype(jnp.bfloat16), w2_ref[v],
                     preferred_element_type=jnp.float32)
        z = _sigmoid(y2 + b2_ref[v])
        lat_ref[v] = z

        # self-expression on both latents (coef kept in f32)
        c = coef_ref[v]                              # (n, n)
        zc_pre = jnp.dot(c, h1, preferred_element_type=jnp.float32)
        zc = jnp.dot(c, z, preferred_element_type=jnp.float32)
        zc_pre_ref[v] = zc_pre
        zc_ref[v] = zc

        # decoder: two linear + sigmoid layers, chained in-register
        y3 = jnp.dot(zc.astype(jnp.bfloat16), w3_ref[v],
                     preferred_element_type=jnp.float32)
        h3 = _sigmoid(y3 + b3_ref[v])
        y4 = jnp.dot(h3.astype(jnp.bfloat16), w4_ref[v],
                     preferred_element_type=jnp.float32)
        recon_ref[v] = _sigmoid(y4 + b4_ref[v])


def _full_spec(shape):
    return pl.BlockSpec(shape, lambda: (0,) * len(shape))


def _fused_view_chain(x_s, w1, b1, w2, b2, w3, b3, w4, b4, coef_s):
    n, p = x_s.shape[1], x_s.shape[2]
    operands = (x_s, w1, b1, w2, b2, w3, b3, w4, b4, coef_s)
    out_shape = tuple(jax.ShapeDtypeStruct((NUM_VIEWS, n, p), jnp.float32)
                      for _ in range(5))
    return pl.pallas_call(
        _view_chain_kernel,
        out_shape=out_shape,
        in_specs=[_full_spec(a.shape) for a in operands],
        out_specs=tuple(_full_spec((NUM_VIEWS, n, p)) for _ in range(5)),
    )(*operands)


# ----------------------------------------------------------------------------
# Glue: one-time parameter preparation, neighbor selection, forward pass
# ----------------------------------------------------------------------------
def choose_neighbor_coefficient(coef, k, _d):
    # TODO(synk): the original `choose_neighbor_coefficient` is not defined in
    # the source; approximated as a per-row top-k-magnitude binary mask.
    abs_c = jnp.abs(coef)
    kth = jnp.sort(abs_c, axis=1)[:, -k][:, None]
    return (abs_c >= kth).astype(jnp.float32)


def make_cae_params(key, num_inputs, num_hidden, num_outputs):
    ks = jax.random.split(key, 8)

    def lin(kw, kb, din, dout):
        scale = 1.0 / jnp.sqrt(jnp.float32(din))
        w = jax.random.uniform(kw, (din, dout), jnp.float32, -scale, scale)
        b = jax.random.uniform(kb, (dout,), jnp.float32, -scale, scale)
        return w, b

    return {
        "enc1": lin(ks[0], ks[1], num_inputs, num_hidden),
        "enc2": lin(ks[2], ks[3], num_hidden, num_outputs),
        "dec1": lin(ks[4], ks[5], num_outputs, num_hidden),
        "dec2": lin(ks[6], ks[7], num_hidden, num_inputs),
    }


def prepare_dsrmsc_params(params):
    """One-time padding / stacking / bf16 cast of the weights (hoisted out of
    the per-call forward). Returns (array_dict, static_dims_dict)."""
    p_ae = [params["ae1"], params["ae2"], params["ae3"]]
    coefs = [params["coe1"], params["coe2"], params["coe3"]]

    feat = tuple(int(ap["enc1"][0].shape[0]) for ap in p_ae)
    nh = int(p_ae[0]["enc1"][0].shape[1])
    no = int(p_ae[0]["enc2"][0].shape[1])
    p = _round_up(max(max(feat), nh, no), LANE)

    def pad_w(w):
        w = jnp.pad(w, ((0, p - w.shape[0]), (0, p - w.shape[1])))
        return w.astype(jnp.bfloat16)          # halve DMA bytes; MXU-native

    def pad_b(b):
        return jnp.pad(b.reshape(1, -1),
                       ((0, 0), (0, p - b.shape[0]))).astype(jnp.float32)

    prep = {}
    for name in ("enc1", "enc2", "dec1", "dec2"):
        prep[name] = (jnp.stack([pad_w(ap[name][0]) for ap in p_ae], axis=0),
                      jnp.stack([pad_b(ap[name][1]) for ap in p_ae], axis=0))
    prep["coef"] = jnp.stack([c.astype(jnp.float32) for c in coefs], axis=0)

    dims = {"p": p, "nh": nh, "no": no, "feat": feat}
    return prep, dims


def dsrmsc_forward(prep, x1, x2, x3, *, dims, neighbor_k=8):
    p, nh, no, feat = dims["p"], dims["nh"], dims["no"], dims["feat"]

    def pad_x(x):
        return jnp.pad(x.astype(jnp.float32), ((0, 0), (0, p - x.shape[1])))

    x_s = jnp.stack([pad_x(x1), pad_x(x2), pad_x(x3)], axis=0)       # (3, n, P)

    w1, b1 = prep["enc1"]
    w2, b2 = prep["enc2"]
    w3, b3 = prep["dec1"]
    w4, b4 = prep["dec2"]
    coef_s = prep["coef"]                                            # (3, n, n)

    lat_pre_p, lat_p, zc_pre_p, zc_p, recon_p = _fused_view_chain(
        x_s, w1, b1, w2, b2, w3, b3, w4, b4, coef_s)

    # slice the real lanes back out (cheap host-side ops)
    v_latent_pre_return = lat_pre_p[:, :, :nh]
    v_latent_return = lat_p[:, :, :no]
    v_z_c_pre_return = zc_pre_p[:, :, :nh]
    v_z_c_return = zc_p[:, :, :no]
    x1_recon = recon_p[0, :, :feat[0]]
    x2_recon = recon_p[1, :, :feat[1]]
    x3_recon = recon_p[2, :, :feat[2]]

    # consensus / pure coefficients: plain jnp elementwise (XLA fuses these);
    # a dedicated pallas_call here is just launch latency at this size.
    coef_det = jax.lax.stop_gradient(coef_s)
    a_s = jnp.stack([choose_neighbor_coefficient(coef_det[v], neighbor_k, 20)
                     for v in range(NUM_VIEWS)], axis=0)
    pures = a_s * coef_s
    pure_1, pure_2, pure_3 = pures[0], pures[1], pures[2]
    consensus = (pure_1 + pure_2 + pure_3) * (1.0 / 3.0)

    return (consensus, pure_1, pure_2, pure_3,
            x1_recon, x2_recon, x3_recon,
            v_latent_pre_return, v_latent_return,
            v_z_c_pre_return, v_z_c_return)


# ----------------------------------------------------------------------------
# Pure-JAX reference (f32 end-to-end) for a light numerical sanity check.
# ----------------------------------------------------------------------------
def _reference_forward(params, x1, x2, x3):
    def lin(wb, x):
        w, b = wb
        return jax.nn.sigmoid(x @ w + b)

    outs = []
    for ap, c, x in ((params["ae1"], params["coe1"], x1),
                     (params["ae2"], params["coe2"], x2),
                     (params["ae3"], params["coe3"], x3)):
        h1 = lin(ap["enc1"], x)
        z = lin(ap["enc2"], h1)
        zc_pre = c @ h1
        zc = c @ z
        recon = lin(ap["dec2"], lin(ap["dec1"], zc))
        outs.append((h1, z, zc_pre, zc, recon))
    return outs


if __name__ == "__main__":
    # small synthetic configuration consistent with the module:
    #   num_sample = 16, feat_size = (32, 24, 16),
    #   num_hidden = (32, 32, 32), num_outputs = (16, 16, 16)
    num_sample = 16
    feat_size = (32, 24, 16)
    num_hidden = (32, 32, 32)
    num_outputs = (16, 16, 16)

    key = jax.random.PRNGKey(0)
    k_ae1, k_ae2, k_ae3, k_c, k_x1, k_x2, k_x3 = jax.random.split(key, 7)

    params = {
        "ae1": make_cae_params(k_ae1, feat_size[0], num_hidden[0], num_outputs[0]),
        "ae2": make_cae_params(k_ae2, feat_size[1], num_hidden[1], num_outputs[1]),
        "ae3": make_cae_params(k_ae3, feat_size[2], num_hidden[2], num_outputs[2]),
    }
    kc1, kc2, kc3 = jax.random.split(k_c, 3)
    params["coe1"] = 1e-2 * jax.random.normal(kc1, (num_sample, num_sample), jnp.float32)
    params["coe2"] = 1e-2 * jax.random.normal(kc2, (num_sample, num_sample), jnp.float32)
    params["coe3"] = 1e-2 * jax.random.normal(kc3, (num_sample, num_sample), jnp.float32)

    x1 = jax.random.normal(k_x1, (num_sample, feat_size[0]), jnp.float32)
    x2 = jax.random.normal(k_x2, (num_sample, feat_size[1]), jnp.float32)
    x3 = jax.random.normal(k_x3, (num_sample, feat_size[2]), jnp.float32)

    # one-time parameter preparation (padding / stacking / bf16) outside jit
    prep, dims = prepare_dsrmsc_params(params)

    fwd = jax.jit(functools.partial(dsrmsc_forward, dims=dims, neighbor_k=8))
    outs = jax.block_until_ready(fwd(prep, x1, x2, x3))

    (consensus, pure_1, pure_2, pure_3,
     x1_recon, x2_recon, x3_recon,
     v_latent_pre, v_latent, v_z_c_pre, v_z_c) = outs

    # shape sanity checks
    assert consensus.shape == (num_sample, num_sample)
    assert pure_1.shape == (num_sample, num_sample)
    assert x1_recon.shape == (num_sample, feat_size[0])
    assert x2_recon.shape == (num_sample, feat_size[1])
    assert x3_recon.shape == (num_sample, feat_size[2])
    assert v_latent_pre.shape == (3, num_sample, num_hidden[0])
    assert v_latent.shape == (3, num_sample, num_outputs[0])
    assert v_z_c_pre.shape == (3, num_sample, num_hidden[0])
    assert v_z_c.shape == (3, num_sample, num_outputs[0])

    # light numerical check against an f32 jnp reference (bf16 weights in the
    # kernel -> allow a generous tolerance)
    ref = _reference_forward(params, x1, x2, x3)
    recons = (x1_recon, x2_recon, x3_recon)
    tol = 2e-2
    for v in range(3):
        h1_r, z_r, zc_pre_r, zc_r, recon_r = ref[v]
        assert float(jnp.max(jnp.abs(v_latent_pre[v] - h1_r))) < tol
        assert float(jnp.max(jnp.abs(v_latent[v] - z_r))) < tol
        assert float(jnp.max(jnp.abs(v_z_c_pre[v] - zc_pre_r))) < tol
        assert float(jnp.max(jnp.abs(v_z_c[v] - zc_r))) < tol
        assert float(jnp.max(jnp.abs(recons[v] - recon_r))) < tol

    print("KERNEL_OK")
</pallas_src>

<mosaic_0001>
module attributes {stable_mosaic.version = 11 : i64} {
  func.func @_view_chain_kernel(%arg0: memref<3x16x128xf32, #tpu.memory_space<vmem>>, %arg1: memref<3x128x128xbf16, #tpu.memory_space<vmem>>, %arg2: memref<3x1x128xf32, #tpu.memory_space<vmem>>, %arg3: memref<3x128x128xbf16, #tpu.memory_space<vmem>>, %arg4: memref<3x1x128xf32, #tpu.memory_space<vmem>>, %arg5: memref<3x128x128xbf16, #tpu.memory_space<vmem>>, %arg6: memref<3x1x128xf32, #tpu.memory_space<vmem>>, %arg7: memref<3x128x128xbf16, #tpu.memory_space<vmem>>, %arg8: memref<3x1x128xf32, #tpu.memory_space<vmem>>, %arg9: memref<3x16x16xf32, #tpu.memory_space<vmem>>, %arg10: memref<3x16x128xf32, #tpu.memory_space<vmem>>, %arg11: memref<3x16x128xf32, #tpu.memory_space<vmem>>, %arg12: memref<3x16x128xf32, #tpu.memory_space<vmem>>, %arg13: memref<3x16x128xf32, #tpu.memory_space<vmem>>, %arg14: memref<3x16x128xf32, #tpu.memory_space<vmem>>) attributes {dimension_semantics = [], scalar_prefetch = 0 : i64, scratch_operands = 0 : i64, tpu.core_type = #tpu.core_type<tc>} {
    %c0 = arith.constant 0 : index
    %c0_0 = arith.constant 0 : index
    %c0_1 = arith.constant 0 : index
    %0 = vector.load %arg0[%c0, %c0_0, %c0_1] : memref<3x16x128xf32, #tpu.memory_space<vmem>>, vector<1x16x128xf32>
    %1 = vector.shape_cast %0 : vector<1x16x128xf32> to vector<16x128xf32>
    %2 = arith.truncf %1 : vector<16x128xf32> to vector<16x128xbf16>
    %c0_2 = arith.constant 0 : index
    %c0_3 = arith.constant 0 : index
    %c0_4 = arith.constant 0 : index
    %3 = vector.load %arg1[%c0_2, %c0_3, %c0_4] : memref<3x128x128xbf16, #tpu.memory_space<vmem>>, vector<1x128x128xbf16>
    %4 = vector.shape_cast %3 : vector<1x128x128xbf16> to vector<128x128xbf16>
    %cst = arith.constant dense<0.000000e+00> : vector<16x128xf32>
    %5 = tpu.matmul %2, %4, %cst {dimension_numbers = #tpu.dot_dimension_numbers<[1], [0], [0], [1], [0, 0, 1, 1], [], []>} : vector<16x128xbf16>, vector<128x128xbf16>, vector<16x128xf32> -> vector<16x128xf32>
    %c0_5 = arith.constant 0 : index
    %c0_6 = arith.constant 0 : index
    %c0_7 = arith.constant 0 : index
    %6 = vector.load %arg2[%c0_5, %c0_6, %c0_7] : memref<3x1x128xf32, #tpu.memory_space<vmem>>, vector<1x1x128xf32>
    %7 = vector.shape_cast %6 : vector<1x1x128xf32> to vector<1x128xf32>
    %8 = vector.broadcast %7 : vector<1x128xf32> to vector<16x128xf32>
    %9 = arith.addf %5, %8 : vector<16x128xf32>
    %cst_8 = arith.constant 5.000000e-01 : f32
    %10 = vector.broadcast %cst_8 : f32 to vector<16x128xf32>
    %11 = arith.mulf %10, %9 : vector<16x128xf32>
    %12 = math.tanh %11 : vector<16x128xf32>
    %cst_9 = arith.constant 5.000000e-01 : f32
    %13 = vector.broadcast %cst_9 : f32 to vector<16x128xf32>
    %14 = arith.mulf %13, %12 : vector<16x128xf32>
    %cst_10 = arith.constant 5.000000e-01 : f32
    %15 = vector.broadcast %cst_10 : f32 to vector<16x128xf32>
    %16 = arith.addf %14, %15 : vector<16x128xf32>
    %c0_11 = arith.constant 0 : index
    %c0_12 = arith.constant 0 : index
    %c0_13 = arith.constant 0 : index
    %17 = vector.load %arg10[%c0_11, %c0_12, %c0_13] : memref<3x16x128xf32, #tpu.memory_space<vmem>>, vector<1x16x128xf32>
    %18 = vector.shape_cast %17 : vector<1x16x128xf32> to vector<16x128xf32>
    %19 = vector.shape_cast %16 : vector<16x128xf32> to vector<1x16x128xf32>
    tpu.vector_store %arg10[%c0_11, %c0_12, %c0_13], %19 {strides = array<i32>} : memref<3x16x128xf32, #tpu.memory_space<vmem>>, vector<1x16x128xf32>,
    %20 = arith.truncf %16 : vector<16x128xf32> to vector<16x128xbf16>
    %c0_14 = arith.constant 0 : index
    %c0_15 = arith.constant 0 : index
    %c0_16 = arith.constant 0 : index
    %21 = vector.load %arg3[%c0_14, %c0_15, %c0_16] : memref<3x128x128xbf16, #tpu.memory_space<vmem>>, vector<1x128x128xbf16>
    %22 = vector.shape_cast %21 : vector<1x128x128xbf16> to vector<128x128xbf16>
    %cst_17 = arith.constant dense<0.000000e+00> : vector<16x128xf32>
    %23 = tpu.matmul %20, %22, %cst_17 {dimension_numbers = #tpu.dot_dimension_numbers<[1], [0], [0], [1], [0, 0, 1, 1], [], []>} : vector<16x128xbf16>, vector<128x128xbf16>, vector<16x128xf32> -> vector<16x128xf32>
    %c0_18 = arith.constant 0 : index
    %c0_19 = arith.constant 0 : index
    %c0_20 = arith.constant 0 : index
    %24 = vector.load %arg4[%c0_18, %c0_19, %c0_20] : memref<3x1x128xf32, #tpu.memory_space<vmem>>, vector<1x1x128xf32>
    %25 = vector.shape_cast %24 : vector<1x1x128xf32> to vector<1x128xf32>
    %26 = vector.broadcast %25 : vector<1x128xf32> to vector<16x128xf32>
    %27 = arith.addf %23, %26 : vector<16x128xf32>
    %cst_21 = arith.constant 5.000000e-01 : f32
    %28 = vector.broadcast %cst_21 : f32 to vector<16x128xf32>
    %29 = arith.mulf %28, %27 : vector<16x128xf32>
    %30 = math.tanh %29 : vector<16x128xf32>
    %cst_22 = arith.constant 5.000000e-01 : f32
    %31 = vector.broadcast %cst_22 : f32 to vector<16x128xf32>
    %32 = arith.mulf %31, %30 : vector<16x128xf32>
    %cst_23 = arith.constant 5.000000e-01 : f32
    %33 = vector.broadcast %cst_23 : f32 to vector<16x128xf32>
    %34 = arith.addf %32, %33 : vector<16x128xf32>
    %c0_24 = arith.constant 0 : index
    %c0_25 = arith.constant 0 : index
    %c0_26 = arith.constant 0 : index
    %35 = vector.load %arg11[%c0_24, %c0_25, %c0_26] : memref<3x16x128xf32, #tpu.memory_space<vmem>>, vector<1x16x128xf32>
    %36 = vector.shape_cast %35 : vector<1x16x128xf32> to vector<16x128xf32>
    %37 = vector.shape_cast %34 : vector<16x128xf32> to vector<1x16x128xf32>
    tpu.vector_store %arg11[%c0_24, %c0_25, %c0_26], %37 {strides = array<i32>} : memref<3x16x128xf32, #tpu.memory_space<vmem>>, vector<1x16x128xf32>,
    %c0_27 = arith.constant 0 : index
    %c0_28 = arith.constant 0 : index
    %c0_29 = arith.constant 0 : index
    %38 = vector.load %arg9[%c0_27, %c0_28, %c0_29] : memref<3x16x16xf32, #tpu.memory_space<vmem>>, vector<1x16x16xf32>
    %39 = vector.shape_cast %38 : vector<1x16x16xf32> to vector<16x16xf32>
    %cst_30 = arith.constant dense<0.000000e+00> : vector<16x128xf32>
    %40 = tpu.matmul %39, %16, %cst_30 {dimension_numbers = #tpu.dot_dimension_numbers<[1], [0], [0], [1], [0, 0, 1, 1], [], []>} : vector<16x16xf32>, vector<16x128xf32>, vector<16x128xf32> -> vector<16x128xf32>
    %cst_31 = arith.constant dense<0.000000e+00> : vector<16x128xf32>
    %41 = tpu.matmul %39, %34, %cst_31 {dimension_numbers = #tpu.dot_dimension_numbers<[1], [0], [0], [1], [0, 0, 1, 1], [], []>} : vector<16x16xf32>, vector<16x128xf32>, vector<16x128xf32> -> vector<16x128xf32>
    %c0_32 = arith.constant 0 : index
    %c0_33 = arith.constant 0 : index
    %c0_34 = arith.constant 0 : index
    %42 = vector.load %arg12[%c0_32, %c0_33, %c0_34] : memref<3x16x128xf32, #tpu.memory_space<vmem>>, vector<1x16x128xf32>
    %43 = vector.shape_cast %42 : vector<1x16x128xf32> to vector<16x128xf32>
    %44 = vector.shape_cast %40 : vector<16x128xf32> to vector<1x16x128xf32>
    tpu.vector_store %arg12[%c0_32, %c0_33, %c0_34], %44 {strides = array<i32>} : memref<3x16x128xf32, #tpu.memory_space<vmem>>, vector<1x16x128xf32>,
    %c0_35 = arith.constant 0 : index
    %c0_36 = arith.constant 0 : index
    %c0_37 = arith.constant 0 : index
    %45 = vector.load %arg13[%c0_35, %c0_36, %c0_37] : memref<3x16x128xf32, #tpu.memory_space<vmem>>, vector<1x16x128xf32>
    %46 = vector.shape_cast %45 : vector<1x16x128xf32> to vector<16x128xf32>
    %47 = vector.shape_cast %41 : vector<16x128xf32> to vector<1x16x128xf32>
    tpu.vector_store %arg13[%c0_35, %c0_36, %c0_37], %47 {strides = array<i32>} : memref<3x16x128xf32, #tpu.memory_space<vmem>>, vector<1x16x128xf32>,
    %48 = arith.truncf %41 : vector<16x128xf32> to vector<16x128xbf16>
    %c0_38 = arith.constant 0 : index
    %c0_39 = arith.constant 0 : index
    %c0_40 = arith.constant 0 : index
    %49 = vector.load %arg5[%c0_38, %c0_39, %c0_40] : memref<3x128x128xbf16, #tpu.memory_space<vmem>>, vector<1x128x128xbf16>
    %50 = vector.shape_cast %49 : vector<1x128x128xbf16> to vector<128x128xbf16>
    %cst_41 = arith.constant dense<0.000000e+00> : vector<16x128xf32>
    %51 = tpu.matmul %48, %50, %cst_41 {dimension_numbers = #tpu.dot_dimension_numbers<[1], [0], [0], [1], [0, 0, 1, 1], [], []>} : vector<16x128xbf16>, vector<128x128xbf16>, vector<16x128xf32> -> vector<16x128xf32>
    %c0_42 = arith.constant 0 : index
    %c0_43 = arith.constant 0 : index
    %c0_44 = arith.constant 0 : index
    %52 = vector.load %arg6[%c0_42, %c0_43, %c0_44] : memref<3x1x128xf32, #tpu.memory_space<vmem>>, vector<1x1x128xf32>
    %53 = vector.shape_cast %52 : vector<1x1x128xf32> to vector<1x128xf32>
    %54 = vector.broadcast %53 : vector<1x128xf32> to vector<16x128xf32>
    %55 = arith.addf %51, %54 : vector<16x128xf32>
    %cst_45 = arith.constant 5.000000e-01 : f32
    %56 = vector.broadcast %cst_45 : f32 to vector<16x128xf32>
    %57 = arith.mulf %56, %55 : vector<16x128xf32>
    %58 = math.tanh %57 : vector<16x128xf32>
    %cst_46 = arith.constant 5.000000e-01 : f32
    %59 = vector.broadcast %cst_46 : f32 to vector<16x128xf32>
    %60 = arith.mulf %59, %58 : vector<16x128xf32>
    %cst_47 = arith.constant 5.000000e-01 : f32
    %61 = vector.broadcast %cst_47 : f32 to vector<16x128xf32>
    %62 = arith.addf %60, %61 : vector<16x128xf32>
    %63 = arith.truncf %62 : vector<16x128xf32> to vector<16x128xbf16>
    %c0_48 = arith.constant 0 : index
    %c0_49 = arith.constant 0 : index
    %c0_50 = arith.constant 0 : index
    %64 = vector.load %arg7[%c0_48, %c0_49, %c0_50] : memref<3x128x128xbf16, #tpu.memory_space<vmem>>, vector<1x128x128xbf16>
    %65 = vector.shape_cast %64 : vector<1x128x128xbf16> to vector<128x128xbf16>
    %cst_51 = arith.constant dense<0.000000e+00> : vector<16x128xf32>
    %66 = tpu.matmul %63, %65, %cst_51 {dimension_numbers = #tpu.dot_dimension_numbers<[1], [0], [0], [1], [0, 0, 1, 1], [], []>} : vector<16x128xbf16>, vector<128x128xbf16>, vector<16x128xf32> -> vector<16x128xf32>
    %c0_52 = arith.constant 0 : index
    %c0_53 = arith.constant 0 : index
    %c0_54 = arith.constant 0 : index
    %67 = vector.load %arg8[%c0_52, %c0_53, %c0_54] : memref<3x1x128xf32, #tpu.memory_space<vmem>>, vector<1x1x128xf32>
    %68 = vector.shape_cast %67 : vector<1x1x128xf32> to vector<1x128xf32>
    %69 = vector.broadcast %68 : vector<1x128xf32> to vector<16x128xf32>
    %70 = arith.addf %66, %69 : vector<16x128xf32>
    %cst_55 = arith.constant 5.000000e-01 : f32
    %71 = vector.broadcast %cst_55 : f32 to vector<16x128xf32>
    %72 = arith.mulf %71, %70 : vector<16x128xf32>
    %73 = math.tanh %72 : vector<16x128xf32>
    %cst_56 = arith.constant 5.000000e-01 : f32
    %74 = vector.broadcast %cst_56 : f32 to vector<16x128xf32>
    %75 = arith.mulf %74, %73 : vector<16x128xf32>
    %cst_57 = arith.constant 5.000000e-01 : f32
    %76 = vector.broadcast %cst_57 : f32 to vector<16x128xf32>
    %77 = arith.addf %75, %76 : vector<16x128xf32>
    %c0_58 = arith.constant 0 : index
    %c0_59 = arith.constant 0 : index
    %c0_60 = arith.constant 0 : index
    %78 = vector.load %arg14[%c0_58, %c0_59, %c0_60] : memref<3x16x128xf32, #tpu.memory_space<vmem>>, vector<1x16x128xf32>
    %79 = vector.shape_cast %78 : vector<1x16x128xf32> to vector<16x128xf32>
    %80 = vector.shape_cast %77 : vector<16x128xf32> to vector<1x16x128xf32>
    tpu.vector_store %arg14[%c0_58, %c0_59, %c0_60], %80 {strides = array<i32>} : memref<3x16x128xf32, #tpu.memory_space<vmem>>, vector<1x16x128xf32>,
    %c1 = arith.constant 1 : index
    %c0_61 = arith.constant 0 : index
    %c0_62 = arith.constant 0 : index
    %81 = vector.load %arg0[%c1, %c0_61, %c0_62] : memref<3x16x128xf32, #tpu.memory_space<vmem>>, vector<1x16x128xf32>
    %82 = vector.shape_cast %81 : vector<1x16x128xf32> to vector<16x128xf32>
    %83 = arith.truncf %82 : vector<16x128xf32> to vector<16x128xbf16>
    %c1_63 = arith.constant 1 : index
    %c0_64 = arith.constant 0 : index
    %c0_65 = arith.constant 0 : index
    %84 = vector.load %arg1[%c1_63, %c0_64, %c0_65] : memref<3x128x128xbf16, #tpu.memory_space<vmem>>, vector<1x128x128xbf16>
    %85 = vector.shape_cast %84 : vector<1x128x128xbf16> to vector<128x128xbf16>
    %cst_66 = arith.constant dense<0.000000e+00> : vector<16x128xf32>
    %86 = tpu.matmul %83, %85, %cst_66 {dimension_numbers = #tpu.dot_dimension_numbers<[1], [0], [0], [1], [0, 0, 1, 1], [], []>} : vector<16x128xbf16>, vector<128x128xbf16>, vector<16x128xf32> -> vector<16x128xf32>
    %c1_67 = arith.constant 1 : index
    %c0_68 = arith.constant 0 : index
    %c0_69 = arith.constant 0 : index
    %87 = vector.load %arg2[%c1_67, %c0_68, %c0_69] : memref<3x1x128xf32, #tpu.memory_space<vmem>>, vector<1x1x128xf32>
    %88 = vector.shape_cast %87 : vector<1x1x128xf32> to vector<1x128xf32>
    %89 = vector.broadcast %88 : vector<1x128xf32> to vector<16x128xf32>
    %90 = arith.addf %86, %89 : vector<16x128xf32>
    %cst_70 = arith.constant 5.000000e-01 : f32
    %91 = vector.broadcast %cst_70 : f32 to vector<16x128xf32>
    %92 = arith.mulf %91, %90 : vector<16x128xf32>
    %93 = math.tanh %92 : vector<16x128xf32>
    %cst_71 = arith.constant 5.000000e-01 : f32
    %94 = vector.broadcast %cst_71 : f32 to vector<16x128xf32>
    %95 = arith.mulf %94, %93 : vector<16x128xf32>
    %cst_72 = arith.constant 5.000000e-01 : f32
    %96 = vector.broadcast %cst_72 : f32 to vector<16x128xf32>
    %97 = arith.addf %95, %96 : vector<16x128xf32>
    %c1_73 = arith.constant 1 : index
    %c0_74 = arith.constant 0 : index
    %c0_75 = arith.constant 0 : index
    %98 = vector.load %arg10[%c1_73, %c0_74, %c0_75] : memref<3x16x128xf32, #tpu.memory_space<vmem>>, vector<1x16x128xf32>
    %99 = vector.shape_cast %98 : vector<1x16x128xf32> to vector<16x128xf32>
    %100 = vector.shape_cast %97 : vector<16x128xf32> to vector<1x16x128xf32>
    tpu.vector_store %arg10[%c1_73, %c0_74, %c0_75], %100 {strides = array<i32>} : memref<3x16x128xf32, #tpu.memory_space<vmem>>, vector<1x16x128xf32>,
    %101 = arith.truncf %97 : vector<16x128xf32> to vector<16x128xbf16>
    %c1_76 = arith.constant 1 : index
    %c0_77 = arith.constant 0 : index
    %c0_78 = arith.constant 0 : index
    %102 = vector.load %arg3[%c1_76, %c0_77, %c0_78] : memref<3x128x128xbf16, #tpu.memory_space<vmem>>, vector<1x128x128xbf16>
    %103 = vector.shape_cast %102 : vector<1x128x128xbf16> to vector<128x128xbf16>
    %cst_79 = arith.constant dense<0.000000e+00> : vector<16x128xf32>
    %104 = tpu.matmul %101, %103, %cst_79 {dimension_numbers = #tpu.dot_dimension_numbers<[1], [0], [0], [1], [0, 0, 1, 1], [], []>} : vector<16x128xbf16>, vector<128x128xbf16>, vector<16x128xf32> -> vector<16x128xf32>
    %c1_80 = arith.constant 1 : index
    %c0_81 = arith.constant 0 : index
    %c0_82 = arith.constant 0 : index
    %105 = vector.load %arg4[%c1_80, %c0_81, %c0_82] : memref<3x1x128xf32, #tpu.memory_space<vmem>>, vector<1x1x128xf32>
    %106 = vector.shape_cast %105 : vector<1x1x128xf32> to vector<1x128xf32>
    %107 = vector.broadcast %106 : vector<1x128xf32> to vector<16x128xf32>
    %108 = arith.addf %104, %107 : vector<16x128xf32>
    %cst_83 = arith.constant 5.000000e-01 : f32
    %109 = vector.broadcast %cst_83 : f32 to vector<16x128xf32>
    %110 = arith.mulf %109, %108 : vector<16x128xf32>
    %111 = math.tanh %110 : vector<16x128xf32>
    %cst_84 = arith.constant 5.000000e-01 : f32
    %112 = vector.broadcast %cst_84 : f32 to vector<16x128xf32>
    %113 = arith.mulf %112, %111 : vector<16x128xf32>
    %cst_85 = arith.constant 5.000000e-01 : f32
    %114 = vector.broadcast %cst_85 : f32 to vector<16x128xf32>
    %115 = arith.addf %113, %114 : vector<16x128xf32>
    %c1_86 = arith.constant 1 : index
    %c0_87 = arith.constant 0 : index
    %c0_88 = arith.constant 0 : index
    %116 = vector.load %arg11[%c1_86, %c0_87, %c0_88] : memref<3x16x128xf32, #tpu.memory_space<vmem>>, vector<1x16x128xf32>
    %117 = vector.shape_cast %116 : vector<1x16x128xf32> to vector<16x128xf32>
    %118 = vector.shape_cast %115 : vector<16x128xf32> to vector<1x16x128xf32>
    tpu.vector_store %arg11[%c1_86, %c0_87, %c0_88], %118 {strides = array<i32>} : memref<3x16x128xf32, #tpu.memory_space<vmem>>, vector<1x16x128xf32>,
    %c1_89 = arith.constant 1 : index
    %c0_90 = arith.constant 0 : index
    %c0_91 = arith.constant 0 : index
    %119 = vector.load %arg9[%c1_89, %c0_90, %c0_91] : memref<3x16x16xf32, #tpu.memory_space<vmem>>, vector<1x16x16xf32>
    %120 = vector.shape_cast %119 : vector<1x16x16xf32> to vector<16x16xf32>
    %cst_92 = arith.constant dense<0.000000e+00> : vector<16x128xf32>
    %121 = tpu.matmul %120, %97, %cst_92 {dimension_numbers = #tpu.dot_dimension_numbers<[1], [0], [0], [1], [0, 0, 1, 1], [], []>} : vector<16x16xf32>, vector<16x128xf32>, vector<16x128xf32> -> vector<16x128xf32>
    %cst_93 = arith.constant dense<0.000000e+00> : vector<16x128xf32>
    %122 = tpu.matmul %120, %115, %cst_93 {dimension_numbers = #tpu.dot_dimension_numbers<[1], [0], [0], [1], [0, 0, 1, 1], [], []>} : vector<16x16xf32>, vector<16x128xf32>, vector<16x128xf32> -> vector<16x128xf32>
    %c1_94 = arith.constant 1 : index
    %c0_95 = arith.constant 0 : index
    %c0_96 = arith.constant 0 : index
    %123 = vector.load %arg12[%c1_94, %c0_95, %c0_96] : memref<3x16x128xf32, #tpu.memory_space<vmem>>, vector<1x16x128xf32>
    %124 = vector.shape_cast %123 : vector<1x16x128xf32> to vector<16x128xf32>
    %125 = vector.shape_cast %121 : vector<16x128xf32> to vector<1x16x128xf32>
    tpu.vector_store %arg12[%c1_94, %c0_95, %c0_96], %125 {strides = array<i32>} : memref<3x16x128xf32, #tpu.memory_space<vmem>>, vector<1x16x128xf32>,
    %c1_97 = arith.constant 1 : index
    %c0_98 = arith.constant 0 : index
    %c0_99 = arith.constant 0 : index
    %126 = vector.load %arg13[%c1_97, %c0_98, %c0_99] : memref<3x16x128xf32, #tpu.memory_space<vmem>>, vector<1x16x128xf32>
    %127 = vector.shape_cast %126 : vector<1x16x128xf32> to vector<16x128xf32>
    %128 = vector.shape_cast %122 : vector<16x128xf32> to vector<1x16x128xf32>
    tpu.vector_store %arg13[%c1_97, %c0_98, %c0_99], %128 {strides = array<i32>} : memref<3x16x128xf32, #tpu.memory_space<vmem>>, vector<1x16x128xf32>,
    %129 = arith.truncf %122 : vector<16x128xf32> to vector<16x128xbf16>
    %c1_100 = arith.constant 1 : index
    %c0_101 = arith.constant 0 : index
    %c0_102 = arith.constant 0 : index
    %130 = vector.load %arg5[%c1_100, %c0_101, %c0_102] : memref<3x128x128xbf16, #tpu.memory_space<vmem>>, vector<1x128x128xbf16>
    %131 = vector.shape_cast %130 : vector<1x128x128xbf16> to vector<128x128xbf16>
    %cst_103 = arith.constant dense<0.000000e+00> : vector<16x128xf32>
    %132 = tpu.matmul %129, %131, %cst_103 {dimension_numbers = #tpu.dot_dimension_numbers<[1], [0], [0], [1], [0, 0, 1, 1], [], []>} : vector<16x128xbf16>, vector<128x128xbf16>, vector<16x128xf32> -> vector<16x128xf32>
    %c1_104 = arith.constant 1 : index
    %c0_105 = arith.constant 0 : index
    %c0_106 = arith.constant 0 : index
    %133 = vector.load %arg6[%c1_104, %c0_105, %c0_106] : memref<3x1x128xf32, #tpu.memory_space<vmem>>, vector<1x1x128xf32>
    %134 = vector.shape_cast %133 : vector<1x1x128xf32> to vector<1x128xf32>
    %135 = vector.broadcast %134 : vector<1x128xf32> to vector<16x128xf32>
    %136 = arith.addf %132, %135 : vector<16x128xf32>
    %cst_107 = arith.constant 5.000000e-01 : f32
    %137 = vector.broadcast %cst_107 : f32 to vector<16x128xf32>
    %138 = arith.mulf %137, %136 : vector<16x128xf32>
    %139 = math.tanh %138 : vector<16x128xf32>
    %cst_108 = arith.constant 5.000000e-01 : f32
    %140 = vector.broadcast %cst_108 : f32 to vector<16x128xf32>
    %141 = arith.mulf %140, %139 : vector<16x128xf32>
    %cst_109 = arith.constant 5.000000e-01 : f32
    %142 = vector.broadcast %cst_109 : f32 to vector<16x128xf32>
    %143 = arith.addf %141, %142 : vector<16x128xf32>
    %144 = arith.truncf %143 : vector<16x128xf32> to vector<16x128xbf16>
    %c1_110 = arith.constant 1 : index
    %c0_111 = arith.constant 0 : index
    %c0_112 = arith.constant 0 : index
    %145 = vector.load %arg7[%c1_110, %c0_111, %c0_112] : memref<3x128x128xbf16, #tpu.memory_space<vmem>>, vector<1x128x128xbf16>
    %146 = vector.shape_cast %145 : vector<1x128x128xbf16> to vector<128x128xbf16>
    %cst_113 = arith.constant dense<0.000000e+00> : vector<16x128xf32>
    %147 = tpu.matmul %144, %146, %cst_113 {dimension_numbers = #tpu.dot_dimension_numbers<[1], [0], [0], [1], [0, 0, 1, 1], [], []>} : vector<16x128xbf16>, vector<128x128xbf16>, vector<16x128xf32> -> vector<16x128xf32>
    %c1_114 = arith.constant 1 : index
    %c0_115 = arith.constant 0 : index
    %c0_116 = arith.constant 0 : index
    %148 = vector.load %arg8[%c1_114, %c0_115, %c0_116] : memref<3x1x128xf32, #tpu.memory_space<vmem>>, vector<1x1x128xf32>
    %149 = vector.shape_cast %148 : vector<1x1x128xf32> to vector<1x128xf32>
    %150 = vector.broadcast %149 : vector<1x128xf32> to vector<16x128xf32>
    %151 = arith.addf %147, %150 : vector<16x128xf32>
    %cst_117 = arith.constant 5.000000e-01 : f32
    %152 = vector.broadcast %cst_117 : f32 to vector<16x128xf32>
    %153 = arith.mulf %152, %151 : vector<16x128xf32>
    %154 = math.tanh %153 : vector<16x128xf32>
    %cst_118 = arith.constant 5.000000e-01 : f32
    %155 = vector.broadcast %cst_118 : f32 to vector<16x128xf32>
    %156 = arith.mulf %155, %154 : vector<16x128xf32>
    %cst_119 = arith.constant 5.000000e-01 : f32
    %157 = vector.broadcast %cst_119 : f32 to vector<16x128xf32>
    %158 = arith.addf %156, %157 : vector<16x128xf32>
    %c1_120 = arith.constant 1 : index
    %c0_121 = arith.constant 0 : index
    %c0_122 = arith.constant 0 : index
    %159 = vector.load %arg14[%c1_120, %c0_121, %c0_122] : memref<3x16x128xf32, #tpu.memory_space<vmem>>, vector<1x16x128xf32>
    %160 = vector.shape_cast %159 : vector<1x16x128xf32> to vector<16x128xf32>
    %161 = vector.shape_cast %158 : vector<16x128xf32> to vector<1x16x128xf32>
    tpu.vector_store %arg14[%c1_120, %c0_121, %c0_122], %161 {strides = array<i32>} : memref<3x16x128xf32, #tpu.memory_space<vmem>>, vector<1x16x128xf32>,
    %c2 = arith.constant 2 : index
    %c0_123 = arith.constant 0 : index
    %c0_124 = arith.constant 0 : index
    %162 = vector.load %arg0[%c2, %c0_123, %c0_124] : memref<3x16x128xf32, #tpu.memory_space<vmem>>, vector<1x16x128xf32>
    %163 = vector.shape_cast %162 : vector<1x16x128xf32> to vector<16x128xf32>
    %164 = arith.truncf %163 : vector<16x128xf32> to vector<16x128xbf16>
    %c2_125 = arith.constant 2 : index
    %c0_126 = arith.constant 0 : index
    %c0_127 = arith.constant 0 : index
    %165 = vector.load %arg1[%c2_125, %c0_126, %c0_127] : memref<3x128x128xbf16, #tpu.memory_space<vmem>>, vector<1x128x128xbf16>
    %166 = vector.shape_cast %165 : vector<1x128x128xbf16> to vector<128x128xbf16>
    %cst_128 = arith.constant dense<0.000000e+00> : vector<16x128xf32>
    %167 = tpu.matmul %164, %166, %cst_128 {dimension_numbers = #tpu.dot_dimension_numbers<[1], [0], [0], [1], [0, 0, 1, 1], [], []>} : vector<16x128xbf16>, vector<128x128xbf16>, vector<16x128xf32> -> vector<16x128xf32>
    %c2_129 = arith.constant 2 : index
    %c0_130 = arith.constant 0 : index
    %c0_131 = arith.constant 0 : index
    %168 = vector.load %arg2[%c2_129, %c0_130, %c0_131] : memref<3x1x128xf32, #tpu.memory_space<vmem>>, vector<1x1x128xf32>
    %169 = vector.shape_cast %168 : vector<1x1x128xf32> to vector<1x128xf32>
    %170 = vector.broadcast %169 : vector<1x128xf32> to vector<16x128xf32>
    %171 = arith.addf %167, %170 : vector<16x128xf32>
    %cst_132 = arith.constant 5.000000e-01 : f32
    %172 = vector.broadcast %cst_132 : f32 to vector<16x128xf32>
    %173 = arith.mulf %172, %171 : vector<16x128xf32>
    %174 = math.tanh %173 : vector<16x128xf32>
    %cst_133 = arith.constant 5.000000e-01 : f32
    %175 = vector.broadcast %cst_133 : f32 to vector<16x128xf32>
    %176 = arith.mulf %175, %174 : vector<16x128xf32>
    %cst_134 = arith.constant 5.000000e-01 : f32
    %177 = vector.broadcast %cst_134 : f32 to vector<16x128xf32>
    %178 = arith.addf %176, %177 : vector<16x128xf32>
    %c2_135 = arith.constant 2 : index
    %c0_136 = arith.constant 0 : index
    %c0_137 = arith.constant 0 : index
    %179 = vector.load %arg10[%c2_135, %c0_136, %c0_137] : memref<3x16x128xf32, #tpu.memory_space<vmem>>, vector<1x16x128xf32>
    %180 = vector.shape_cast %179 : vector<1x16x128xf32> to vector<16x128xf32>
    %181 = vector.shape_cast %178 : vector<16x128xf32> to vector<1x16x128xf32>
    tpu.vector_store %arg10[%c2_135, %c0_136, %c0_137], %181 {strides = array<i32>} : memref<3x16x128xf32, #tpu.memory_space<vmem>>, vector<1x16x128xf32>,
    %182 = arith.truncf %178 : vector<16x128xf32> to vector<16x128xbf16>
    %c2_138 = arith.constant 2 : index
    %c0_139 = arith.constant 0 : index
    %c0_140 = arith.constant 0 : index
    %183 = vector.load %arg3[%c2_138, %c0_139, %c0_140] : memref<3x128x128xbf16, #tpu.memory_space<vmem>>, vector<1x128x128xbf16>
    %184 = vector.shape_cast %183 : vector<1x128x128xbf16> to vector<128x128xbf16>
    %cst_141 = arith.constant dense<0.000000e+00> : vector<16x128xf32>
    %185 = tpu.matmul %182, %184, %cst_141 {dimension_numbers = #tpu.dot_dimension_numbers<[1], [0], [0], [1], [0, 0, 1, 1], [], []>} : vector<16x128xbf16>, vector<128x128xbf16>, vector<16x128xf32> -> vector<16x128xf32>
    %c2_142 = arith.constant 2 : index
    %c0_143 = arith.constant 0 : index
    %c0_144 = arith.constant 0 : index
    %186 = vector.load %arg4[%c2_142, %c0_143, %c0_144] : memref<3x1x128xf32, #tpu.memory_space<vmem>>, vector<1x1x128xf32>
    %187 = vector.shape_cast %186 : vector<1x1x128xf32> to vector<1x128xf32>
    %188 = vector.broadcast %187 : vector<1x128xf32> to vector<16x128xf32>
    %189 = arith.addf %185, %188 : vector<16x128xf32>
    %cst_145 = arith.constant 5.000000e-01 : f32
    %190 = vector.broadcast %cst_145 : f32 to vector<16x128xf32>
    %191 = arith.mulf %190, %189 : vector<16x128xf32>
    %192 = math.tanh %191 : vector<16x128xf32>
    %cst_146 = arith.constant 5.000000e-01 : f32
    %193 = vector.broadcast %cst_146 : f32 to vector<16x128xf32>
    %194 = arith.mulf %193, %192 : vector<16x128xf32>
    %cst_147 = arith.constant 5.000000e-01 : f32
    %195 = vector.broadcast %cst_147 : f32 to vector<16x128xf32>
    %196 = arith.addf %194, %195 : vector<16x128xf32>
    %c2_148 = arith.constant 2 : index
    %c0_149 = arith.constant 0 : index
    %c0_150 = arith.constant 0 : index
    %197 = vector.load %arg11[%c2_148, %c0_149, %c0_150] : memref<3x16x128xf32, #tpu.memory_space<vmem>>, vector<1x16x128xf32>
    %198 = vector.shape_cast %197 : vector<1x16x128xf32> to vector<16x128xf32>
    %199 = vector.shape_cast %196 : vector<16x128xf32> to vector<1x16x128xf32>
    tpu.vector_store %arg11[%c2_148, %c0_149, %c0_150], %199 {strides = array<i32>} : memref<3x16x128xf32, #tpu.memory_space<vmem>>, vector<1x16x128xf32>,
    %c2_151 = arith.constant 2 : index
    %c0_152 = arith.constant 0 : index
    %c0_153 = arith.constant 0 : index
    %200 = vector.load %arg9[%c2_151, %c0_152, %c0_153] : memref<3x16x16xf32, #tpu.memory_space<vmem>>, vector<1x16x16xf32>
    %201 = vector.shape_cast %200 : vector<1x16x16xf32> to vector<16x16xf32>
    %cst_154 = arith.constant dense<0.000000e+00> : vector<16x128xf32>
    %202 = tpu.matmul %201, %178, %cst_154 {dimension_numbers = #tpu.dot_dimension_numbers<[1], [0], [0], [1], [0, 0, 1, 1], [], []>} : vector<16x16xf32>, vector<16x128xf32>, vector<16x128xf32> -> vector<16x128xf32>
    %cst_155 = arith.constant dense<0.000000e+00> : vector<16x128xf32>
    %203 = tpu.matmul %201, %196, %cst_155 {dimension_numbers = #tpu.dot_dimension_numbers<[1], [0], [0], [1], [0, 0, 1, 1], [], []>} : vector<16x16xf32>, vector<16x128xf32>, vector<16x128xf32> -> vector<16x128xf32>
    %c2_156 = arith.constant 2 : index
    %c0_157 = arith.constant 0 : index
    %c0_158 = arith.constant 0 : index
    %204 = vector.load %arg12[%c2_156, %c0_157, %c0_158] : memref<3x16x128xf32, #tpu.memory_space<vmem>>, vector<1x16x128xf32>
    %205 = vector.shape_cast %204 : vector<1x16x128xf32> to vector<16x128xf32>
    %206 = vector.shape_cast %202 : vector<16x128xf32> to vector<1x16x128xf32>
    tpu.vector_store %arg12[%c2_156, %c0_157, %c0_158], %206 {strides = array<i32>} : memref<3x16x128xf32, #tpu.memory_space<vmem>>, vector<1x16x128xf32>,
    %c2_159 = arith.constant 2 : index
    %c0_160 = arith.constant 0 : index
    %c0_161 = arith.constant 0 : index
    %207 = vector.load %arg13[%c2_159, %c0_160, %c0_161] : memref<3x16x128xf32, #tpu.memory_space<vmem>>, vector<1x16x128xf32>
    %208 = vector.shape_cast %207 : vector<1x16x128xf32> to vector<16x128xf32>
    %209 = vector.shape_cast %203 : vector<16x128xf32> to vector<1x16x128xf32>
    tpu.vector_store %arg13[%c2_159, %c0_160, %c0_161], %209 {strides = array<i32>} : memref<3x16x128xf32, #tpu.memory_space<vmem>>, vector<1x16x128xf32>,
    %210 = arith.truncf %203 : vector<16x128xf32> to vector<16x128xbf16>
    %c2_162 = arith.constant 2 : index
    %c0_163 = arith.constant 0 : index
    %c0_164 = arith.constant 0 : index
    %211 = vector.load %arg5[%c2_162, %c0_163, %c0_164] : memref<3x128x128xbf16, #tpu.memory_space<vmem>>, vector<1x128x128xbf16>
    %212 = vector.shape_cast %211 : vector<1x128x128xbf16> to vector<128x128xbf16>
    %cst_165 = arith.constant dense<0.000000e+00> : vector<16x128xf32>
    %213 = tpu.matmul %210, %212, %cst_165 {dimension_numbers = #tpu.dot_dimension_numbers<[1], [0], [0], [1], [0, 0, 1, 1], [], []>} : vector<16x128xbf16>, vector<128x128xbf16>, vector<16x128xf32> -> vector<16x128xf32>
    %c2_166 = arith.constant 2 : index
    %c0_167 = arith.constant 0 : index
    %c0_168 = arith.constant 0 : index
    %214 = vector.load %arg6[%c2_166, %c0_167, %c0_168] : memref<3x1x128xf32, #tpu.memory_space<vmem>>, vector<1x1x128xf32>
    %215 = vector.shape_cast %214 : vector<1x1x128xf32> to vector<1x128xf32>
    %216 = vector.broadcast %215 : vector<1x128xf32> to vector<16x128xf32>
    %217 = arith.addf %213, %216 : vector<16x128xf32>
    %cst_169 = arith.constant 5.000000e-01 : f32
    %218 = vector.broadcast %cst_169 : f32 to vector<16x128xf32>
    %219 = arith.mulf %218, %217 : vector<16x128xf32>
    %220 = math.tanh %219 : vector<16x128xf32>
    %cst_170 = arith.constant 5.000000e-01 : f32
    %221 = vector.broadcast %cst_170 : f32 to vector<16x128xf32>
    %222 = arith.mulf %221, %220 : vector<16x128xf32>
    %cst_171 = arith.constant 5.000000e-01 : f32
    %223 = vector.broadcast %cst_171 : f32 to vector<16x128xf32>
    %224 = arith.addf %222, %223 : vector<16x128xf32>
    %225 = arith.truncf %224 : vector<16x128xf32> to vector<16x128xbf16>
    %c2_172 = arith.constant 2 : index
    %c0_173 = arith.constant 0 : index
    %c0_174 = arith.constant 0 : index
    %226 = vector.load %arg7[%c2_172, %c0_173, %c0_174] : memref<3x128x128xbf16, #tpu.memory_space<vmem>>, vector<1x128x128xbf16>
    %227 = vector.shape_cast %226 : vector<1x128x128xbf16> to vector<128x128xbf16>
    %cst_175 = arith.constant dense<0.000000e+00> : vector<16x128xf32>
    %228 = tpu.matmul %225, %227, %cst_175 {dimension_numbers = #tpu.dot_dimension_numbers<[1], [0], [0], [1], [0, 0, 1, 1], [], []>} : vector<16x128xbf16>, vector<128x128xbf16>, vector<16x128xf32> -> vector<16x128xf32>
    %c2_176 = arith.constant 2 : index
    %c0_177 = arith.constant 0 : index
    %c0_178 = arith.constant 0 : index
    %229 = vector.load %arg8[%c2_176, %c0_177, %c0_178] : memref<3x1x128xf32, #tpu.memory_space<vmem>>, vector<1x1x128xf32>
    %230 = vector.shape_cast %229 : vector<1x1x128xf32> to vector<1x128xf32>
    %231 = vector.broadcast %230 : vector<1x128xf32> to vector<16x128xf32>
    %232 = arith.addf %228, %231 : vector<16x128xf32>
    %cst_179 = arith.constant 5.000000e-01 : f32
    %233 = vector.broadcast %cst_179 : f32 to vector<16x128xf32>
    %234 = arith.mulf %233, %232 : vector<16x128xf32>
    %235 = math.tanh %234 : vector<16x128xf32>
    %cst_180 = arith.constant 5.000000e-01 : f32
    %236 = vector.broadcast %cst_180 : f32 to vector<16x128xf32>
    %237 = arith.mulf %236, %235 : vector<16x128xf32>
    %cst_181 = arith.constant 5.000000e-01 : f32
    %238 = vector.broadcast %cst_181 : f32 to vector<16x128xf32>
    %239 = arith.addf %237, %238 : vector<16x128xf32>
    %c2_182 = arith.constant 2 : index
    %c0_183 = arith.constant 0 : index
    %c0_184 = arith.constant 0 : index
    %240 = vector.load %arg14[%c2_182, %c0_183, %c0_184] : memref<3x16x128xf32, #tpu.memory_space<vmem>>, vector<1x16x128xf32>
    %241 = vector.shape_cast %240 : vector<1x16x128xf32> to vector<16x128xf32>
    %242 = vector.shape_cast %239 : vector<16x128xf32> to vector<1x16x128xf32>
    tpu.vector_store %arg14[%c2_182, %c0_183, %c0_184], %242 {strides = array<i32>} : memref<3x16x128xf32, #tpu.memory_space<vmem>>, vector<1x16x128xf32>,
    return
  }
}

</mosaic_0001>

<llo_original>
// kernel: dsrmsc_forward.1
$region0: #{dsrmsc_forward.1}
  #allocation0 [shape = 'u32[]', space=smem, size = 0x4, offset = 0x4, fixed_abs, tag = 'smem constant byte address 0x4 - core index']
  #allocation1 [shape = 'u32[144,128]{1,0:T(1,128)}', space=vmem, size = 0x12000, scoped, tag = 'internal scratch']
  %s0 = inlined_call_operand.vmem [shape: f32[3,16,128], index: 0, kind: input, shape index: {}]
  %s1 = inlined_call_operand.vmem [shape: bf16[3,128,128], index: 1, kind: input, shape index: {}]
  %s2 = inlined_call_operand.vmem [shape: f32[3,1,128], index: 2, kind: input, shape index: {}]
  %s3 = inlined_call_operand.vmem [shape: bf16[3,128,128], index: 3, kind: input, shape index: {}]
  %s4 = inlined_call_operand.vmem [shape: f32[3,1,128], index: 4, kind: input, shape index: {}]
  %s5 = inlined_call_operand.vmem [shape: bf16[3,128,128], index: 5, kind: input, shape index: {}]
  %s6 = inlined_call_operand.vmem [shape: f32[3,1,128], index: 6, kind: input, shape index: {}]
  %s7 = inlined_call_operand.vmem [shape: bf16[3,128,128], index: 7, kind: input, shape index: {}]
  %s8 = inlined_call_operand.vmem [shape: f32[3,1,128], index: 8, kind: input, shape index: {}]
  %s9 = inlined_call_operand.vmem [shape: f32[3,16,16], index: 9, kind: input, shape index: {}]
  %s10 = inlined_call_operand.hbm [shape: f32[3,16,128], index: 10, kind: output, shape index: {0}]
  %s11 = inlined_call_operand.hbm [shape: f32[3,16,128], index: 11, kind: output, shape index: {1}]
  %s12 = inlined_call_operand.hbm [shape: f32[3,16,128], index: 12, kind: output, shape index: {2}]
  %s13 = inlined_call_operand.hbm [shape: f32[3,16,128], index: 13, kind: output, shape index: {3}]
  %s14 = inlined_call_operand.vmem [shape: f32[3,16,128], index: 14, kind: output, shape index: {4}]
  %15 = xla_tuple %s10, %s11, %s12, %s13, %s14
  %s16 = sld [smem:[#allocation0]]
  $region82: #{dsrmsc_forward.1} parent=0
    _
  %s18 = ssub.s32 1, %s16
  %s19 = scalar_select 0, %s18, %s16
  $region1: #{dsrmsc_forward.1} parent=0
    #allocation2 [shape = 'u8[24576]{0}', space=vmem, size = 0x6000, scoped, tag = 'output window, operand 0, single buffered']
    #allocation3 [shape = 's32[1]{0}', space=sflag, size = 0x4, scoped, tag = 'scoped memory for dsrmsc_forward.1']
    #allocation4 [shape = 'u8[24576]{0}', space=vmem, size = 0x6000, scoped, tag = 'output window, operand 1, single buffered']
    #allocation5 [shape = 's32[1]{0}', space=sflag, size = 0x4, scoped, tag = 'scoped memory for dsrmsc_forward.1']
    #allocation6 [shape = 'u8[24576]{0}', space=vmem, size = 0x6000, scoped, tag = 'output window, operand 2, single buffered']
    #allocation7 [shape = 'u8[24576]{0}', space=vmem, size = 0x6000, scoped, tag = 'output window, operand 3, single buffered']
    #allocation8 [shape = 's32[1]{0}', space=sflag, size = 0x4, scoped, tag = 'scoped memory for dsrmsc_forward.1']
    %20 = vsyncpa [#allocation3], 0
    %21 = vsyncpa [#allocation5], 0
    %22 = vsyncpa [#allocation8], 0
    // Predicated region
    $region2: #{dsrmsc_forward.1} parent=1 // pred_check
      _
    $region3: #{dsrmsc_forward.1} parent=1 // pred_check_branch
      %24 = sbr.rel (0) target = $region5
    $region4: #{dsrmsc_forward.1} parent=1 // pred_region
      _
    $region5: #{dsrmsc_forward.1} parent=1 // pred_fallthru
      _
    // Predicated region
    $region6: #{dsrmsc_forward.1} parent=1 // pred_check
      _
    $region7: #{dsrmsc_forward.1} parent=1 // pred_check_branch
      %26 = sbr.rel (0) target = $region9
    $region8: #{dsrmsc_forward.1} parent=1 // pred_region
      _
    $region9: #{dsrmsc_forward.1} parent=1 // pred_fallthru
      _
    // Predicated region
    $region10: #{dsrmsc_forward.1} parent=1 // pred_check
      _
    $region11: #{dsrmsc_forward.1} parent=1 // pred_check_branch
      %28 = sbr.rel (0) target = $region13
    $region12: #{dsrmsc_forward.1} parent=1 // pred_region
      _
    $region13: #{dsrmsc_forward.1} parent=1 // pred_fallthru
      _
    // Predicated region
    $region14: #{dsrmsc_forward.1} parent=1 // pred_check
      _
    $region15: #{dsrmsc_forward.1} parent=1 // pred_check_branch
      %30 = sbr.rel (0) target = $region17
    $region16: #{dsrmsc_forward.1} parent=1 // pred_region
      _
    $region17: #{dsrmsc_forward.1} parent=1 // pred_fallthru
      _
    // Predicated region
    $region18: #{dsrmsc_forward.1} parent=1 // pred_check
      _
    $region19: #{dsrmsc_forward.1} parent=1 // pred_check_branch
      %32 = sbr.rel (0) target = $region21
    $region20: #{dsrmsc_forward.1} parent=1 // pred_region
      _
    $region21: #{dsrmsc_forward.1} parent=1 // pred_fallthru
      _
    // Predicated region
    $region22: #{dsrmsc_forward.1} parent=1 // pred_check
      _
    $region23: #{dsrmsc_forward.1} parent=1 // pred_check_branch
      %34 = sbr.rel (0) target = $region25
    $region24: #{dsrmsc_forward.1} parent=1 // pred_region
      _
    $region25: #{dsrmsc_forward.1} parent=1 // pred_fallthru
      _
    // Predicated region
    $region26: #{dsrmsc_forward.1} parent=1 // pred_check
      _
    $region27: #{dsrmsc_forward.1} parent=1 // pred_check_branch
      %36 = sbr.rel (0) target = $region29
    $region28: #{dsrmsc_forward.1} parent=1 // pred_region
      _
    $region29: #{dsrmsc_forward.1} parent=1 // pred_fallthru
      _
    // Predicated region
    $region30: #{dsrmsc_forward.1} parent=1 // pred_check
      _
    $region31: #{dsrmsc_forward.1} parent=1 // pred_check_branch
      %38 = sbr.rel (0) target = $region33
    $region32: #{dsrmsc_forward.1} parent=1 // pred_region
      _
    $region33: #{dsrmsc_forward.1} parent=1 // pred_fallthru
      _
    // Predicated region
    $region34: #{dsrmsc_forward.1} parent=1 // pred_check
      _
    $region35: #{dsrmsc_forward.1} parent=1 // pred_check_branch
      %40 = sbr.rel (0) target = $region37
    $region36: #{dsrmsc_forward.1} parent=1 // pred_region
      _
    $region37: #{dsrmsc_forward.1} parent=1 // pred_fallthru
      _
    // Predicated region
    $region38: #{dsrmsc_forward.1} parent=1 // pred_check
      _
    $region39: #{dsrmsc_forward.1} parent=1 // pred_check_branch
      %42 = sbr.rel (0) target = $region41
    $region40: #{dsrmsc_forward.1} parent=1 // pred_region
      _
    $region41: #{dsrmsc_forward.1} parent=1 // pred_fallthru
      _
    %v44 = vld [vmem:[%s0] sm:$0xff]
    %v45 = vld [vmem:[%s0 + $0x8] sm:$0xff]
    %v46 = vpack.c.bf16 %v45, %v44
    %v47 = vld [vmem:[%s1] sm:$0xf]
    %v48 = vld [vmem:[%s1 + $0x4] sm:$0xf]
    %v49 = vld [vmem:[%s1 + $0x8] sm:$0xf]
    %v50 = vld [vmem:[%s1 + $0xc] sm:$0xf]
    %v51 = vld [vmem:[%s1 + $0x10] sm:$0xf]
    %v52 = vld [vmem:[%s1 + $0x14] sm:$0xf]
    %v53 = vld [vmem:[%s1 + $0x18] sm:$0xf]
    %v54 = vld [vmem:[%s1 + $0x1c] sm:$0xf]
    %v55 = vld [vmem:[%s1 + $0x20] sm:$0xf]
    %v56 = vld [vmem:[%s1 + $0x24] sm:$0xf]
    %v57 = vld [vmem:[%s1 + $0x28] sm:$0xf]
    %v58 = vld [vmem:[%s1 + $0x2c] sm:$0xf]
    %v59 = vld [vmem:[%s1 + $0x30] sm:$0xf]
    %v60 = vld [vmem:[%s1 + $0x34] sm:$0xf]
    %v61 = vld [vmem:[%s1 + $0x38] sm:$0xf]
    %v62 = vld [vmem:[%s1 + $0x3c] sm:$0xf]
    %v63 = vld [vmem:[%s2] sm:$0x1]
    %v65 = vlaneseq
    %v66 = vshrl.u32 %v65, 7
    %v67 = vsub.s32 0, %v66
    %v68 = vrot.slane %v63, %v67
    %v86 = vunpack.c.l.b16 %v47
    %v87 = vunpack.c.l.b16 %v48
    %v88 = vunpack.c.l.b16 %v49
    %v89 = vunpack.c.l.b16 %v50
    %v90 = vunpack.c.l.b16 %v51
    %v91 = vunpack.c.l.b16 %v52
    %v92 = vunpack.c.l.b16 %v53
    %v93 = vunpack.c.l.b16 %v54
    %v94 = vunpack.c.l.b16 %v55
    %v95 = vunpack.c.l.b16 %v56
    %v96 = vunpack.c.l.b16 %v57
    %v97 = vunpack.c.l.b16 %v58
    %v98 = vunpack.c.l.b16 %v59
    %v99 = vunpack.c.l.b16 %v60
    %v100 = vunpack.c.l.b16 %v61
    %v101 = vunpack.c.l.b16 %v62
    %v102 = vpack.c.b16 %v87, %v86
    %v103 = vpack.c.b16 %v89, %v88
    %v104 = vpack.c.b16 %v91, %v90
    %v105 = vpack.c.b16 %v93, %v92
    %v106 = vpack.c.b16 %v95, %v94
    %v107 = vpack.c.b16 %v97, %v96
    %v108 = vpack.c.b16 %v99, %v98
    %v109 = vpack.c.b16 %v101, %v100
    %118 = vmatprep.subr.bf16.mxu0 0
    %119 = vmatpush1.bf16.msra.mxu0 %v102
    %120 = vmatprep.subr.bf16.mxu0 0
    %121 = vmatpush1.bf16.msra.mxu0 %v103
    %122 = vmatprep.subr.bf16.mxu0 0
    %123 = vmatpush1.bf16.msra.mxu0 %v104
    %124 = vmatprep.subr.bf16.mxu0 0
    %125 = vmatpush1.bf16.msra.mxu0 %v105
    %126 = vmatprep.subr.bf16.mxu0 0
    %127 = vmatpush1.bf16.msra.mxu0 %v106
    %128 = vmatprep.subr.bf16.mxu0 0
    %129 = vmatpush1.bf16.msra.mxu0 %v107
    %130 = vmatprep.subr.bf16.mxu0 0
    %131 = vmatpush1.bf16.msra.mxu0 %v108
    %132 = vmatprep.subr.bf16.mxu0 0
    %133 = vmatpush1.bf16.msra.mxu0 %v109
    %134 = vmatprep.subr.bf16.mxu0 0
    %135 = vmatpush1.bf16.msra.mxu0 0
    %136 = vmatprep.subr.bf16.mxu0 0
    %137 = vmatpush1.bf16.msra.mxu0 0
    %138 = vmatprep.subr.bf16.mxu0 0
    %139 = vmatpush1.bf16.msra.mxu0 0
    %140 = vmatprep.subr.bf16.mxu0 0
    %141 = vmatpush1.bf16.msra.mxu0 0
    %142 = vmatprep.subr.bf16.mxu0 0
    %143 = vmatpush1.bf16.msra.mxu0 0
    %144 = vmatprep.subr.bf16.mxu0 0
    %145 = vmatpush1.bf16.msra.mxu0 0
    %146 = vmatprep.subr.bf16.mxu0 0
    %147 = vmatpush1.bf16.msra.mxu0 0
    %148 = vmatprep.subr.bf16.mxu0 0
    %149 = vmatpush1.bf16.msra.mxu0 0
    %150 = vmatprep.mubr.bf16.mxu0 0
    %151 = vmatmul.mubr.bf16.gmra.mrb[0].mxu0 %v46
    %v152 = vpop.f32.mrb[0].mxu0
    %v153 = vadd.f32 %v68, %v152
    %v154 = vpop.f32.mrb[0].mxu0
    %v155 = vpop.f32.mrb[0].mxu0
    %v156 = vadd.f32 %v68, %v155
    %v157 = vpop.f32.mrb[0].mxu0
    %158 = vdwg.mxu0
    %v159 = vmul.f32 %v153, 0.5
    %v160 = vmul.f32 %v156, 0.5
    %v161 = vtanh.pop %v159
    %v162 = vtanh.pop %v160
    %v163 = vmul.f32 %v161, 0.5
    %v164 = vmul.f32 %v162, 0.5
    %v165 = vadd.f32 %v163, 0.5
    %v166 = vadd.f32 %v164, 0.5
    %167 = vst [vmem:[#allocation2] sm:$0xff] %v165
    %168 = vst [vmem:[#allocation2 + $0x8] sm:$0xff] %v166
    %v169 = vpack.c.bf16 %v166, %v165
    %v170 = vld [vmem:[%s3] sm:$0xf]
    %v171 = vld [vmem:[%s3 + $0x4] sm:$0xf]
    %v172 = vld [vmem:[%s3 + $0x8] sm:$0xf]
    %v173 = vld [vmem:[%s3 + $0xc] sm:$0xf]
    %v174 = vld [vmem:[%s3 + $0x10] sm:$0xf]
    %v175 = vld [vmem:[%s3 + $0x14] sm:$0xf]
    %v176 = vld [vmem:[%s3 + $0x18] sm:$0xf]
    %v177 = vld [vmem:[%s3 + $0x1c] sm:$0xf]
    %v178 = vld [vmem:[%s3 + $0x20] sm:$0xf]
    %v179 = vld [vmem:[%s3 + $0x24] sm:$0xf]
    %v180 = vld [vmem:[%s3 + $0x28] sm:$0xf]
    %v181 = vld [vmem:[%s3 + $0x2c] sm:$0xf]
    %v182 = vld [vmem:[%s3 + $0x30] sm:$0xf]
    %v183 = vld [vmem:[%s3 + $0x34] sm:$0xf]
    %v184 = vld [vmem:[%s3 + $0x38] sm:$0xf]
    %v185 = vld [vmem:[%s3 + $0x3c] sm:$0xf]
    %v186 = vld [vmem:[%s4] sm:$0x1]
    %v188 = vlaneseq
    %v189 = vshrl.u32 %v188, 7
    %v190 = vsub.s32 0, %v189
    %v191 = vrot.slane %v186, %v190
    %v209 = vunpack.c.l.b16 %v170
    %v210 = vunpack.c.l.b16 %v171
    %v211 = vunpack.c.l.b16 %v172
    %v212 = vunpack.c.l.b16 %v173
    %v213 = vunpack.c.l.b16 %v174
    %v214 = vunpack.c.l.b16 %v175
    %v215 = vunpack.c.l.b16 %v176
    %v216 = vunpack.c.l.b16 %v177
    %v217 = vunpack.c.l.b16 %v178
    %v218 = vunpack.c.l.b16 %v179
    %v219 = vunpack.c.l.b16 %v180
    %v220 = vunpack.c.l.b16 %v181
    %v221 = vunpack.c.l.b16 %v182
    %v222 = vunpack.c.l.b16 %v183
    %v223 = vunpack.c.l.b16 %v184
    %v224 = vunpack.c.l.b16 %v185
    %v225 = vpack.c.b16 %v210, %v209
    %v226 = vpack.c.b16 %v212, %v211
    %v227 = vpack.c.b16 %v214, %v213
    %v228 = vpack.c.b16 %v216, %v215
    %v229 = vpack.c.b16 %v218, %v217
    %v230 = vpack.c.b16 %v220, %v219
    %v231 = vpack.c.b16 %v222, %v221
    %v232 = vpack.c.b16 %v224, %v223
    %241 = vmatprep.subr.bf16.mxu0 0
    %242 = vmatpush1.bf16.msra.mxu0 %v225
    %243 = vmatprep.subr.bf16.mxu0 0
    %244 = vmatpush1.bf16.msra.mxu0 %v226
    %245 = vmatprep.subr.bf16.mxu0 0
    %246 = vmatpush1.bf16.msra.mxu0 %v227
    %247 = vmatprep.subr.bf16.mxu0 0
    %248 = vmatpush1.bf16.msra.mxu0 %v228
    %249 = vmatprep.subr.bf16.mxu0 0
    %250 = vmatpush1.bf16.msra.mxu0 %v229
    %251 = vmatprep.subr.bf16.mxu0 0
    %252 = vmatpush1.bf16.msra.mxu0 %v230
    %253 = vmatprep.subr.bf16.mxu0 0
    %254 = vmatpush1.bf16.msra.mxu0 %v231
    %255 = vmatprep.subr.bf16.mxu0 0
    %256 = vmatpush1.bf16.msra.mxu0 %v232
    %257 = vmatprep.subr.bf16.mxu0 0
    %258 = vmatpush1.bf16.msra.mxu0 0
    %259 = vmatprep.subr.bf16.mxu0 0
    %260 = vmatpush1.bf16.msra.mxu0 0
    %261 = vmatprep.subr.bf16.mxu0 0
    %262 = vmatpush1.bf16.msra.mxu0 0
    %263 = vmatprep.subr.bf16.mxu0 0
    %264 = vmatpush1.bf16.msra.mxu0 0
    %265 = vmatprep.subr.bf16.mxu0 0
    %266 = vmatpush1.bf16.msra.mxu0 0
    %267 = vmatprep.subr.bf16.mxu0 0
    %268 = vmatpush1.bf16.msra.mxu0 0
    %269 = vmatprep.subr.bf16.mxu0 0
    %270 = vmatpush1.bf16.msra.mxu0 0
    %271 = vmatprep.subr.bf16.mxu0 0
    %272 = vmatpush1.bf16.msra.mxu0 0
    %273 = vmatprep.mubr.bf16.mxu0 0
    %274 = vmatmul.mubr.bf16.gmra.mrb[0].mxu0 %v169
    %v275 = vpop.f32.mrb[0].mxu0
    %v276 = vadd.f32 %v191, %v275
    %v277 = vpop.f32.mrb[0].mxu0
    %v278 = vpop.f32.mrb[0].mxu0
    %v279 = vadd.f32 %v191, %v278
    %v280 = vpop.f32.mrb[0].mxu0
    %281 = vdwg.mxu0
    %v282 = vmul.f32 %v276, 0.5
    %v283 = vmul.f32 %v279, 0.5
    %v284 = vtanh.pop %v282
    %v285 = vtanh.pop %v283
    %v286 = vmul.f32 %v284, 0.5
    %v287 = vmul.f32 %v285, 0.5
    %v288 = vadd.f32 %v286, 0.5
    %v289 = vadd.f32 %v287, 0.5
    %290 = vst [vmem:[#allocation4] sm:$0xff] %v288
    %291 = vst [vmem:[#allocation4 + $0x8] sm:$0xff] %v289
    %v292 = vld [vmem:[%s9] sm:$0xff]
    %v293 = vld [vmem:[%s9 + $0x8] sm:$0xff]
    %vm294 = vcmask 130048
    %v296 = vsel %vm294, %v292, 0
    %v299 = vsel %vm294, %v293, 0
    %301 = vmatprep.subr.mxu0 0.0
    %302 = vmatpush1.msra.mxu0 %v165
    %303 = vmatprep.subr.mxu0 0.0
    %304 = vmatpush1.msra.mxu0 %v166
    %305 = vmatprep.subr.mxu0 0.0
    %306 = vmatpush1.msra.mxu0 0.0
    %307 = vmatprep.subr.mxu0 0.0
    %308 = vmatpush1.msra.mxu0 0.0
    %309 = vmatprep.subr.mxu0 0.0
    %310 = vmatpush1.msra.mxu0 0.0
    %311 = vmatprep.subr.mxu0 0.0
    %312 = vmatpush1.msra.mxu0 0.0
    %313 = vmatprep.subr.mxu0 0.0
    %314 = vmatpush1.msra.mxu0 0.0
    %315 = vmatprep.subr.mxu0 0.0
    %316 = vmatpush1.msra.mxu0 0.0
    %317 = vmatprep.subr.mxu0 0.0
    %318 = vmatpush1.msra.mxu0 0.0
    %319 = vmatprep.subr.mxu0 0.0
    %320 = vmatpush1.msra.mxu0 0.0
    %321 = vmatprep.subr.mxu0 0.0
    %322 = vmatpush1.msra.mxu0 0.0
    %323 = vmatprep.subr.mxu0 0.0
    %324 = vmatpush1.msra.mxu0 0.0
    %325 = vmatprep.subr.mxu0 0.0
    %326 = vmatpush1.msra.mxu0 0.0
    %327 = vmatprep.subr.mxu0 0.0
    %328 = vmatpush1.msra.mxu0 0.0
    %329 = vmatprep.subr.mxu0 0.0
    %330 = vmatpush1.msra.mxu0 0.0
    %331 = vmatprep.subr.mxu0 0.0
    %332 = vmatpush1.msra.mxu0 0.0
    %333 = vmatprep.subr.mxu0 0.0
    %334 = vmatpush1.msra.mxu0 0.0
    %335 = vmatprep.subr.mxu0 0.0
    %336 = vmatpush1.msra.mxu0 0.0
    %337 = vmatprep.subr.mxu0 0.0
    %338 = vmatpush1.msra.mxu0 0.0
    %339 = vmatprep.subr.mxu0 0.0
    %340 = vmatpush1.msra.mxu0 0.0
    %341 = vmatprep.subr.mxu0 0.0
    %342 = vmatpush1.msra.mxu0 0.0
    %343 = vmatprep.subr.mxu0 0.0
    %344 = vmatpush1.msra.mxu0 0.0
    %345 = vmatprep.subr.mxu0 0.0
    %346 = vmatpush1.msra.mxu0 0.0
    %347 = vmatprep.subr.mxu0 0.0
    %348 = vmatpush1.msra.mxu0 0.0
    %349 = vmatprep.subr.mxu0 0.0
    %350 = vmatpush1.msra.mxu0 0.0
    %351 = vmatprep.subr.mxu0 0.0
    %352 = vmatpush1.msra.mxu0 0.0
    %353 = vmatprep.subr.mxu0 0.0
    %354 = vmatpush1.msra.mxu0 0.0
    %355 = vmatprep.subr.mxu0 0.0
    %356 = vmatpush1.msra.mxu0 0.0
    %357 = vmatprep.subr.mxu0 0.0
    %358 = vmatpush1.msra.mxu0 0.0
    %359 = vmatprep.subr.mxu0 0.0
    %360 = vmatpush1.msra.mxu0 0.0
    %361 = vmatprep.subr.mxu0 0.0
    %362 = vmatpush1.msra.mxu0 0.0
    %363 = vmatprep.subr.mxu0 0.0
    %364 = vmatpush1.msra.mxu0 0.0
    %365 = vmatprep.mubr.f32.mxu0 0.0
    %366 = vmatmul.mubr.f32.gmra.mrb[0].mxu0 %v296
    %v367 = vpop.f32.mrb[0].mxu0
    %v368 = vadd.f32 0.0, %v367
    %v369 = vpop.f32.mrb[0].mxu0
    %370 = vmatprep.mubr.f32.mxu0 0.0
    %371 = vmatmul.mubr.f32.gmra.mrb[0].mxu0 %v299
    %v372 = vpop.f32.mrb[0].mxu0
    %v373 = vadd.f32 0.0, %v372
    %v374 = vpop.f32.mrb[0].mxu0
    %375 = vdwg.mxu0
    %376 = vmatprep.subr.mxu0 0.0
    %377 = vmatpush1.msra.mxu0 %v288
    %378 = vmatprep.subr.mxu0 0.0
    %379 = vmatpush1.msra.mxu0 %v289
    %380 = vmatprep.subr.mxu0 0.0
    %381 = vmatpush1.msra.mxu0 0.0
    %382 = vmatprep.subr.mxu0 0.0
    %383 = vmatpush1.msra.mxu0 0.0
    %384 = vmatprep.subr.mxu0 0.0
    %385 = vmatpush1.msra.mxu0 0.0
    %386 = vmatprep.subr.mxu0 0.0
    %387 = vmatpush1.msra.mxu0 0.0
    %388 = vmatprep.subr.mxu0 0.0
    %389 = vmatpush1.msra.mxu0 0.0
    %390 = vmatprep.subr.mxu0 0.0
    %391 = vmatpush1.msra.mxu0 0.0
    %392 = vmatprep.subr.mxu0 0.0
    %393 = vmatpush1.msra.mxu0 0.0
    %394 = vmatprep.subr.mxu0 0.0
    %395 = vmatpush1.msra.mxu0 0.0
    %396 = vmatprep.subr.mxu0 0.0
    %397 = vmatpush1.msra.mxu0 0.0
    %398 = vmatprep.subr.mxu0 0.0
    %399 = vmatpush1.msra.mxu0 0.0
    %400 = vmatprep.subr.mxu0 0.0
    %401 = vmatpush1.msra.mxu0 0.0
    %402 = vmatprep.subr.mxu0 0.0
    %403 = vmatpush1.msra.mxu0 0.0
    %404 = vmatprep.subr.mxu0 0.0
    %405 = vmatpush1.msra.mxu0 0.0
    %406 = vmatprep.subr.mxu0 0.0
    %407 = vmatpush1.msra.mxu0 0.0
    %408 = vmatprep.subr.mxu0 0.0
    %409 = vmatpush1.msra.mxu0 0.0
    %410 = vmatprep.subr.mxu0 0.0
    %411 = vmatpush1.msra.mxu0 0.0
    %412 = vmatprep.subr.mxu0 0.0
    %413 = vmatpush1.msra.mxu0 0.0
    %414 = vmatprep.subr.mxu0 0.0
    %415 = vmatpush1.msra.mxu0 0.0
    %416 = vmatprep.subr.mxu0 0.0
    %417 = vmatpush1.msra.mxu0 0.0
    %418 = vmatprep.subr.mxu0 0.0
    %419 = vmatpush1.msra.mxu0 0.0
    %420 = vmatprep.subr.mxu0 0.0
    %421 = vmatpush1.msra.mxu0 0.0
    %422 = vmatprep.subr.mxu0 0.0
    %423 = vmatpush1.msra.mxu0 0.0
    %424 = vmatprep.subr.mxu0 0.0
    %425 = vmatpush1.msra.mxu0 0.0
    %426 = vmatprep.subr.mxu0 0.0
    %427 = vmatpush1.msra.mxu0 0.0
    %428 = vmatprep.subr.mxu0 0.0
    %429 = vmatpush1.msra.mxu0 0.0
    %430 = vmatprep.subr.mxu0 0.0
    %431 = vmatpush1.msra.mxu0 0.0
    %432 = vmatprep.subr.mxu0 0.0
    %433 = vmatpush1.msra.mxu0 0.0
    %434 = vmatprep.subr.mxu0 0.0
    %435 = vmatpush1.msra.mxu0 0.0
    %436 = vmatprep.subr.mxu0 0.0
    %437 = vmatpush1.msra.mxu0 0.0
    %438 = vmatprep.subr.mxu0 0.0
    %439 = vmatpush1.msra.mxu0 0.0
    %440 = vmatprep.mubr.f32.mxu0 0.0
    %441 = vmatmul.mubr.f32.gmra.mrb[0].mxu0 %v296
    %v442 = vpop.f32.mrb[0].mxu0
    %v443 = vadd.f32 0.0, %v442
    %v444 = vpop.f32.mrb[0].mxu0
    %445 = vmatprep.mubr.f32.mxu0 0.0
    %446 = vmatmul.mubr.f32.gmra.mrb[0].mxu0 %v299
    %v447 = vpop.f32.mrb[0].mxu0
    %v448 = vadd.f32 0.0, %v447
    %v449 = vpop.f32.mrb[0].mxu0
    %450 = vdwg.mxu0
    %451 = vst [vmem:[#allocation6] sm:$0xff] %v368
    %452 = vst [vmem:[#allocation6 + $0x8] sm:$0xff] %v373
    %453 = vst [vmem:[#allocation7] sm:$0xff] %v443
    %454 = vst [vmem:[#allocation7 + $0x8] sm:$0xff] %v448
    %v455 = vpack.c.bf16 %v448, %v443
    %v456 = vld [vmem:[%s5] sm:$0xf]
    %v457 = vld [vmem:[%s5 + $0x4] sm:$0xf]
    %v458 = vld [vmem:[%s5 + $0x8] sm:$0xf]
    %v459 = vld [vmem:[%s5 + $0xc] sm:$0xf]
    %v460 = vld [vmem:[%s5 + $0x10] sm:$0xf]
    %v461 = vld [vmem:[%s5 + $0x14] sm:$0xf]
    %v462 = vld [vmem:[%s5 + $0x18] sm:$0xf]
    %v463 = vld [vmem:[%s5 + $0x1c] sm:$0xf]
    %v464 = vld [vmem:[%s5 + $0x20] sm:$0xf]
    %v465 = vld [vmem:[%s5 + $0x24] sm:$0xf]
    %v466 = vld [vmem:[%s5 + $0x28] sm:$0xf]
    %v467 = vld [vmem:[%s5 + $0x2c] sm:$0xf]
    %v468 = vld [vmem:[%s5 + $0x30] sm:$0xf]
    %v469 = vld [vmem:[%s5 + $0x34] sm:$0xf]
    %v470 = vld [vmem:[%s5 + $0x38] sm:$0xf]
    %v471 = vld [vmem:[%s5 + $0x3c] sm:$0xf]
    %v472 = vld [vmem:[%s6] sm:$0x1]
    %v474 = vlaneseq
    %v475 = vshrl.u32 %v474, 7
    %v476 = vsub.s32 0, %v475
    %v477 = vrot.slane %v472, %v476
    %v495 = vunpack.c.l.b16 %v456
    %v496 = vunpack.c.l.b16 %v457
    %v497 = vunpack.c.l.b16 %v458
    %v498 = vunpack.c.l.b16 %v459
    %v499 = vunpack.c.l.b16 %v460
    %v500 = vunpack.c.l.b16 %v461
    %v501 = vunpack.c.l.b16 %v462
    %v502 = vunpack.c.l.b16 %v463
    %v503 = vunpack.c.l.b16 %v464
    %v504 = vunpack.c.l.b16 %v465
    %v505 = vunpack.c.l.b16 %v466
    %v506 = vunpack.c.l.b16 %v467
    %v507 = vunpack.c.l.b16 %v468
    %v508 = vunpack.c.l.b16 %v469
    %v509 = vunpack.c.l.b16 %v470
    %v510 = vunpack.c.l.b16 %v471
    %v511 = vpack.c.b16 %v496, %v495
    %v512 = vpack.c.b16 %v498, %v497
    %v513 = vpack.c.b16 %v500, %v499
    %v514 = vpack.c.b16 %v502, %v501
    %v515 = vpack.c.b16 %v504, %v503
    %v516 = vpack.c.b16 %v506, %v505
    %v517 = vpack.c.b16 %v508, %v507
    %v518 = vpack.c.b16 %v510, %v509
    %527 = vmatprep.subr.bf16.mxu0 0
    %528 = vmatpush1.bf16.msra.mxu0 %v511
    %529 = vmatprep.subr.bf16.mxu0 0
    %530 = vmatpush1.bf16.msra.mxu0 %v512
    %531 = vmatprep.subr.bf16.mxu0 0
    %532 = vmatpush1.bf16.msra.mxu0 %v513
    %533 = vmatprep.subr.bf16.mxu0 0
    %534 = vmatpush1.bf16.msra.mxu0 %v514
    %535 = vmatprep.subr.bf16.mxu0 0
    %536 = vmatpush1.bf16.msra.mxu0 %v515
    %537 = vmatprep.subr.bf16.mxu0 0
    %538 = vmatpush1.bf16.msra.mxu0 %v516
    %539 = vmatprep.subr.bf16.mxu0 0
    %540 = vmatpush1.bf16.msra.mxu0 %v517
    %541 = vmatprep.subr.bf16.mxu0 0
    %542 = vmatpush1.bf16.msra.mxu0 %v518
    %543 = vmatprep.subr.bf16.mxu0 0
    %544 = vmatpush1.bf16.msra.mxu0 0
    %545 = vmatprep.subr.bf16.mxu0 0
    %546 = vmatpush1.bf16.msra.mxu0 0
    %547 = vmatprep.subr.bf16.mxu0 0
    %548 = vmatpush1.bf16.msra.mxu0 0
    %549 = vmatprep.subr.bf16.mxu0 0
    %550 = vmatpush1.bf16.msra.mxu0 0
    %551 = vmatprep.subr.bf16.mxu0 0
    %552 = vmatpush1.bf16.msra.mxu0 0
    %553 = vmatprep.subr.bf16.mxu0 0
    %554 = vmatpush1.bf16.msra.mxu0 0
    %555 = vmatprep.subr.bf16.mxu0 0
    %556 = vmatpush1.bf16.msra.mxu0 0
    %557 = vmatprep.subr.bf16.mxu0 0
    %558 = vmatpush1.bf16.msra.mxu0 0
    %559 = vmatprep.mubr.bf16.mxu0 0
    %560 = vmatmul.mubr.bf16.gmra.mrb[0].mxu0 %v455
    %v561 = vpop.f32.mrb[0].mxu0
    %v562 = vadd.f32 %v477, %v561
    %v563 = vpop.f32.mrb[0].mxu0
    %v564 = vpop.f32.mrb[0].mxu0
    %v565 = vadd.f32 %v477, %v564
    %v566 = vpop.f32.mrb[0].mxu0
    %567 = vdwg.mxu0
    %v568 = vmul.f32 %v562, 0.5
    %v569 = vmul.f32 %v565, 0.5
    %v570 = vtanh.pop %v568
    %v571 = vtanh.pop %v569
    %v572 = vmul.f32 %v570, 0.5
    %v573 = vmul.f32 %v571, 0.5
    %v574 = vadd.f32 %v572, 0.5
    %v575 = vadd.f32 %v573, 0.5
    %v576 = vpack.c.bf16 %v575, %v574
    %v577 = vld [vmem:[%s7] sm:$0xf]
    %v578 = vld [vmem:[%s7 + $0x4] sm:$0xf]
    %v579 = vld [vmem:[%s7 + $0x8] sm:$0xf]
    %v580 = vld [vmem:[%s7 + $0xc] sm:$0xf]
    %v581 = vld [vmem:[%s7 + $0x10] sm:$0xf]
    %v582 = vld [vmem:[%s7 + $0x14] sm:$0xf]
    %v583 = vld [vmem:[%s7 + $0x18] sm:$0xf]
    %v584 = vld [vmem:[%s7 + $0x1c] sm:$0xf]
    %v585 = vld [vmem:[%s7 + $0x20] sm:$0xf]
    %v586 = vld [vmem:[%s7 + $0x24] sm:$0xf]
    %v587 = vld [vmem:[%s7 + $0x28] sm:$0xf]
    %v588 = vld [vmem:[%s7 + $0x2c] sm:$0xf]
    %v589 = vld [vmem:[%s7 + $0x30] sm:$0xf]
    %v590 = vld [vmem:[%s7 + $0x34] sm:$0xf]
    %v591 = vld [vmem:[%s7 + $0x38] sm:$0xf]
    %v592 = vld [vmem:[%s7 + $0x3c] sm:$0xf]
    %v593 = vld [vmem:[%s8] sm:$0x1]
    %v595 = vlaneseq
    %v596 = vshrl.u32 %v595, 7
    %v597 = vsub.s32 0, %v596
    %v598 = vrot.slane %v593, %v597
    %v616 = vunpack.c.l.b16 %v577
    %v617 = vunpack.c.l.b16 %v578
    %v618 = vunpack.c.l.b16 %v579
    %v619 = vunpack.c.l.b16 %v580
    %v620 = vunpack.c.l.b16 %v581
    %v621 = vunpack.c.l.b16 %v582
    %v622 = vunpack.c.l.b16 %v583
    %v623 = vunpack.c.l.b16 %v584
    %v624 = vunpack.c.l.b16 %v585
    %v625 = vunpack.c.l.b16 %v586
    %v626 = vunpack.c.l.b16 %v587
    %v627 = vunpack.c.l.b16 %v588
    %v628 = vunpack.c.l.b16 %v589
    %v629 = vunpack.c.l.b16 %v590
    %v630 = vunpack.c.l.b16 %v591
    %v631 = vunpack.c.l.b16 %v592
    %v632 = vpack.c.b16 %v617, %v616
    %v633 = vpack.c.b16 %v619, %v618
    %v634 = vpack.c.b16 %v621, %v620
    %v635 = vpack.c.b16 %v623, %v622
    %v636 = vpack.c.b16 %v625, %v624
    %v637 = vpack.c.b16 %v627, %v626
    %v638 = vpack.c.b16 %v629, %v628
    %v639 = vpack.c.b16 %v631, %v630
    %648 = vmatprep.subr.bf16.mxu0 0
    %649 = vmatpush1.bf16.msra.mxu0 %v632
    %650 = vmatprep.subr.bf16.mxu0 0
    %651 = vmatpush1.bf16.msra.mxu0 %v633
    %652 = vmatprep.subr.bf16.mxu0 0
    %653 = vmatpush1.bf16.msra.mxu0 %v634
    %654 = vmatprep.subr.bf16.mxu0 0
    %655 = vmatpush1.bf16.msra.mxu0 %v635
    %656 = vmatprep.subr.bf16.mxu0 0
    %657 = vmatpush1.bf16.msra.mxu0 %v636
    %658 = vmatprep.subr.bf16.mxu0 0
    %659 = vmatpush1.bf16.msra.mxu0 %v637
    %660 = vmatprep.subr.bf16.mxu0 0
    %661 = vmatpush1.bf16.msra.mxu0 %v638
    %662 = vmatprep.subr.bf16.mxu0 0
    %663 = vmatpush1.bf16.msra.mxu0 %v639
    %664 = vmatprep.subr.bf16.mxu0 0
    %665 = vmatpush1.bf16.msra.mxu0 0
    %666 = vmatprep.subr.bf16.mxu0 0
    %667 = vmatpush1.bf16.msra.mxu0 0
    %668 = vmatprep.subr.bf16.mxu0 0
    %669 = vmatpush1.bf16.msra.mxu0 0
    %670 = vmatprep.subr.bf16.mxu0 0
    %671 = vmatpush1.bf16.msra.mxu0 0
    %672 = vmatprep.subr.bf16.mxu0 0
    %673 = vmatpush1.bf16.msra.mxu0 0
    %674 = vmatprep.subr.bf16.mxu0 0
    %675 = vmatpush1.bf16.msra.mxu0 0
    %676 = vmatprep.subr.bf16.mxu0 0
    %677 = vmatpush1.bf16.msra.mxu0 0
    %678 = vmatprep.subr.bf16.mxu0 0
    %679 = vmatpush1.bf16.msra.mxu0 0
    %680 = vmatprep.mubr.bf16.mxu0 0
    %681 = vmatmul.mubr.bf16.gmra.mrb[0].mxu0 %v576
    %v682 = vpop.f32.mrb[0].mxu0
    %v683 = vadd.f32 %v598, %v682
    %v684 = vpop.f32.mrb[0].mxu0
    %v685 = vpop.f32.mrb[0].mxu0
    %v686 = vadd.f32 %v598, %v685
    %v687 = vpop.f32.mrb[0].mxu0
    %688 = vdwg.mxu0
    %v689 = vmul.f32 %v683, 0.5
    %v690 = vmul.f32 %v686, 0.5
    %v691 = vtanh.pop %v689
    %v692 = vtanh.pop %v690
    %v693 = vmul.f32 %v691, 0.5
    %v694 = vmul.f32 %v692, 0.5
    %v695 = vadd.f32 %v693, 0.5
    %v696 = vadd.f32 %v694, 0.5
    %697 = vst [vmem:[%s14] sm:$0xff] %v695
    %698 = vst [vmem:[%s14 + $0x8] sm:$0xff] %v696
    %s699 = scalar_lea.vmem %s0, 16
    %v700 = vld [vmem:[%s699] sm:$0xff]
    %v701 = vld [vmem:[%s699 + $0x8] sm:$0xff]
    %v702 = vpack.c.bf16 %v701, %v700
    %s703 = scalar_lea.vmem %s1, 64
    %v704 = vld [vmem:[%s703] sm:$0xf]
    %v705 = vld [vmem:[%s703 + $0x4] sm:$0xf]
    %v706 = vld [vmem:[%s703 + $0x8] sm:$0xf]
    %v707 = vld [vmem:[%s703 + $0xc] sm:$0xf]
    %v708 = vld [vmem:[%s703 + $0x10] sm:$0xf]
    %v709 = vld [vmem:[%s703 + $0x14] sm:$0xf]
    %v710 = vld [vmem:[%s703 + $0x18] sm:$0xf]
    %v711 = vld [vmem:[%s703 + $0x1c] sm:$0xf]
    %v712 = vld [vmem:[%s703 + $0x20] sm:$0xf]
    %v713 = vld [vmem:[%s703 + $0x24] sm:$0xf]
    %v714 = vld [vmem:[%s703 + $0x28] sm:$0xf]
    %v715 = vld [vmem:[%s703 + $0x2c] sm:$0xf]
    %v716 = vld [vmem:[%s703 + $0x30] sm:$0xf]
    %v717 = vld [vmem:[%s703 + $0x34] sm:$0xf]
    %v718 = vld [vmem:[%s703 + $0x38] sm:$0xf]
    %v719 = vld [vmem:[%s703 + $0x3c] sm:$0xf]
    %s720 = scalar_lea.vmem %s2, 1
    %v721 = vld [vmem:[%s720] sm:$0x1]
    %v723 = vlaneseq
    %v724 = vshrl.u32 %v723, 7
    %v725 = vsub.s32 0, %v724
    %v726 = vrot.slane %v721, %v725
    %v744 = vunpack.c.l.b16 %v704
    %v745 = vunpack.c.l.b16 %v705
    %v746 = vunpack.c.l.b16 %v706
    %v747 = vunpack.c.l.b16 %v707
    %v748 = vunpack.c.l.b16 %v708
    %v749 = vunpack.c.l.b16 %v709
    %v750 = vunpack.c.l.b16 %v710
    %v751 = vunpack.c.l.b16 %v711
    %v752 = vunpack.c.l.b16 %v712
    %v753 = vunpack.c.l.b16 %v713
    %v754 = vunpack.c.l.b16 %v714
    %v755 = vunpack.c.l.b16 %v715
    %v756 = vunpack.c.l.b16 %v716
    %v757 = vunpack.c.l.b16 %v717
    %v758 = vunpack.c.l.b16 %v718
    %v759 = vunpack.c.l.b16 %v719
    %v760 = vpack.c.b16 %v745, %v744
    %v761 = vpack.c.b16 %v747, %v746
    %v762 = vpack.c.b16 %v749, %v748
    %v763 = vpack.c.b16 %v751, %v750
    %v764 = vpack.c.b16 %v753, %v752
    %v765 = vpack.c.b16 %v755, %v754
    %v766 = vpack.c.b16 %v757, %v756
    %v767 = vpack.c.b16 %v759, %v758
    %776 = vmatprep.subr.bf16.mxu0 0
    %777 = vmatpush1.bf16.msra.mxu0 %v760
    %778 = vmatprep.subr.bf16.mxu0 0
    %779 = vmatpush1.bf16.msra.mxu0 %v761
    %780 = vmatprep.subr.bf16.mxu0 0
    %781 = vmatpush1.bf16.msra.mxu0 %v762
    %782 = vmatprep.subr.bf16.mxu0 0
    %783 = vmatpush1.bf16.msra.mxu0 %v763
    %784 = vmatprep.subr.bf16.mxu0 0
    %785 = vmatpush1.bf16.msra.mxu0 %v764
    %786 = vmatprep.subr.bf16.mxu0 0
    %787 = vmatpush1.bf16.msra.mxu0 %v765
    %788 = vmatprep.subr.bf16.mxu0 0
    %789 = vmatpush1.bf16.msra.mxu0 %v766
    %790 = vmatprep.subr.bf16.mxu0 0
    %791 = vmatpush1.bf16.msra.mxu0 %v767
    %792 = vmatprep.subr.bf16.mxu0 0
    %793 = vmatpush1.bf16.msra.mxu0 0
    %794 = vmatprep.subr.bf16.mxu0 0
    %795 = vmatpush1.bf16.msra.mxu0 0
    %796 = vmatprep.subr.bf16.mxu0 0
    %797 = vmatpush1.bf16.msra.mxu0 0
    %798 = vmatprep.subr.bf16.mxu0 0
    %799 = vmatpush1.bf16.msra.mxu0 0
    %800 = vmatprep.subr.bf16.mxu0 0
    %801 = vmatpush1.bf16.msra.mxu0 0
    %802 = vmatprep.subr.bf16.mxu0 0
    %803 = vmatpush1.bf16.msra.mxu0 0
    %804 = vmatprep.subr.bf16.mxu0 0
    %805 = vmatpush1.bf16.msra.mxu0 0
    %806 = vmatprep.subr.bf16.mxu0 0
    %807 = vmatpush1.bf16.msra.mxu0 0
    %808 = vmatprep.mubr.bf16.mxu0 0
    %809 = vmatmul.mubr.bf16.gmra.mrb[0].mxu0 %v702
    %v810 = vpop.f32.mrb[0].mxu0
    %v811 = vadd.f32 %v726, %v810
    %v812 = vpop.f32.mrb[0].mxu0
    %v813 = vpop.f32.mrb[0].mxu0
    %v814 = vadd.f32 %v726, %v813
    %v815 = vpop.f32.mrb[0].mxu0
    %816 = vdwg.mxu0
    %v817 = vmul.f32 %v811, 0.5
    %v818 = vmul.f32 %v814, 0.5
    %v819 = vtanh.pop %v817
    %v820 = vtanh.pop %v818
    %v821 = vmul.f32 %v819, 0.5
    %v822 = vmul.f32 %v820, 0.5
    %v823 = vadd.f32 %v821, 0.5
    %v824 = vadd.f32 %v822, 0.5
    %s825 = scalar_lea.vmem [#allocation2], 16
    %826 = vst [vmem:[%s825] sm:$0xff] %v823
    %827 = vst [vmem:[%s825 + $0x8] sm:$0xff] %v824
    %v828 = vpack.c.bf16 %v824, %v823
    %s829 = scalar_lea.vmem %s3, 64
    %v830 = vld [vmem:[%s829] sm:$0xf]
    %v831 = vld [vmem:[%s829 + $0x4] sm:$0xf]
    %v832 = vld [vmem:[%s829 + $0x8] sm:$0xf]
    %v833 = vld [vmem:[%s829 + $0xc] sm:$0xf]
    %v834 = vld [vmem:[%s829 + $0x10] sm:$0xf]
    %v835 = vld [vmem:[%s829 + $0x14] sm:$0xf]
    %v836 = vld [vmem:[%s829 + $0x18] sm:$0xf]
    %v837 = vld [vmem:[%s829 + $0x1c] sm:$0xf]
    %v838 = vld [vmem:[%s829 + $0x20] sm:$0xf]
    %v839 = vld [vmem:[%s829 + $0x24] sm:$0xf]
    %v840 = vld [vmem:[%s829 + $0x28] sm:$0xf]
    %v841 = vld [vmem:[%s829 + $0x2c] sm:$0xf]
    %v842 = vld [vmem:[%s829 + $0x30] sm:$0xf]
    %v843 = vld [vmem:[%s829 + $0x34] sm:$0xf]
    %v844 = vld [vmem:[%s829 + $0x38] sm:$0xf]
    %v845 = vld [vmem:[%s829 + $0x3c] sm:$0xf]
    %s846 = scalar_lea.vmem %s4, 1
    %v847 = vld [vmem:[%s846] sm:$0x1]
    %v849 = vlaneseq
    %v850 = vshrl.u32 %v849, 7
    %v851 = vsub.s32 0, %v850
    %v852 = vrot.slane %v847, %v851
    %v870 = vunpack.c.l.b16 %v830
    %v871 = vunpack.c.l.b16 %v831
    %v872 = vunpack.c.l.b16 %v832
    %v873 = vunpack.c.l.b16 %v833
    %v874 = vunpack.c.l.b16 %v834
    %v875 = vunpack.c.l.b16 %v835
    %v876 = vunpack.c.l.b16 %v836
    %v877 = vunpack.c.l.b16 %v837
    %v878 = vunpack.c.l.b16 %v838
    %v879 = vunpack.c.l.b16 %v839
    %v880 = vunpack.c.l.b16 %v840
    %v881 = vunpack.c.l.b16 %v841
    %v882 = vunpack.c.l.b16 %v842
    %v883 = vunpack.c.l.b16 %v843
    %v884 = vunpack.c.l.b16 %v844
    %v885 = vunpack.c.l.b16 %v845
    %v886 = vpack.c.b16 %v871, %v870
    %v887 = vpack.c.b16 %v873, %v872
    %v888 = vpack.c.b16 %v875, %v874
    %v889 = vpack.c.b16 %v877, %v876
    %v890 = vpack.c.b16 %v879, %v878
    %v891 = vpack.c.b16 %v881, %v880
    %v892 = vpack.c.b16 %v883, %v882
    %v893 = vpack.c.b16 %v885, %v884
    %902 = vmatprep.subr.bf16.mxu0 0
    %903 = vmatpush1.bf16.msra.mxu0 %v886
    %904 = vmatprep.subr.bf16.mxu0 0
    %905 = vmatpush1.bf16.msra.mxu0 %v887
    %906 = vmatprep.subr.bf16.mxu0 0
    %907 = vmatpush1.bf16.msra.mxu0 %v888
    %908 = vmatprep.subr.bf16.mxu0 0
    %909 = vmatpush1.bf16.msra.mxu0 %v889
    %910 = vmatprep.subr.bf16.mxu0 0
    %911 = vmatpush1.bf16.msra.mxu0 %v890
    %912 = vmatprep.subr.bf16.mxu0 0
    %913 = vmatpush1.bf16.msra.mxu0 %v891
    %914 = vmatprep.subr.bf16.mxu0 0
    %915 = vmatpush1.bf16.msra.mxu0 %v892
    %916 = vmatprep.subr.bf16.mxu0 0
    %917 = vmatpush1.bf16.msra.mxu0 %v893
    %918 = vmatprep.subr.bf16.mxu0 0
    %919 = vmatpush1.bf16.msra.mxu0 0
    %920 = vmatprep.subr.bf16.mxu0 0
    %921 = vmatpush1.bf16.msra.mxu0 0
    %922 = vmatprep.subr.bf16.mxu0 0
    %923 = vmatpush1.bf16.msra.mxu0 0
    %924 = vmatprep.subr.bf16.mxu0 0
    %925 = vmatpush1.bf16.msra.mxu0 0
    %926 = vmatprep.subr.bf16.mxu0 0
    %927 = vmatpush1.bf16.msra.mxu0 0
    %928 = vmatprep.subr.bf16.mxu0 0
    %929 = vmatpush1.bf16.msra.mxu0 0
    %930 = vmatprep.subr.bf16.mxu0 0
    %931 = vmatpush1.bf16.msra.mxu0 0
    %932 = vmatprep.subr.bf16.mxu0 0
    %933 = vmatpush1.bf16.msra.mxu0 0
    %934 = vmatprep.mubr.bf16.mxu0 0
    %935 = vmatmul.mubr.bf16.gmra.mrb[0].mxu0 %v828
    %v936 = vpop.f32.mrb[0].mxu0
    %v937 = vadd.f32 %v852, %v936
    %v938 = vpop.f32.mrb[0].mxu0
    %v939 = vpop.f32.mrb[0].mxu0
    %v940 = vadd.f32 %v852, %v939
    %v941 = vpop.f32.mrb[0].mxu0
    %942 = vdwg.mxu0
    %v943 = vmul.f32 %v937, 0.5
    %v944 = vmul.f32 %v940, 0.5
    %v945 = vtanh.pop %v943
    %v946 = vtanh.pop %v944
    %v947 = vmul.f32 %v945, 0.5
    %v948 = vmul.f32 %v946, 0.5
    %v949 = vadd.f32 %v947, 0.5
    %v950 = vadd.f32 %v948, 0.5
    %s951 = scalar_lea.vmem [#allocation4], 16
    %952 = vst [vmem:[%s951] sm:$0xff] %v949
    %953 = vst [vmem:[%s951 + $0x8] sm:$0xff] %v950
    %s954 = scalar_lea.vmem %s9, 16
    %v955 = vld [vmem:[%s954] sm:$0xff]
    %v956 = vld [vmem:[%s954 + $0x8] sm:$0xff]
    %v958 = vsel %vm294, %v955, 0
    %v961 = vsel %vm294, %v956, 0
    %963 = vmatprep.subr.mxu0 0.0
    %964 = vmatpush1.msra.mxu0 %v823
    %965 = vmatprep.subr.mxu0 0.0
    %966 = vmatpush1.msra.mxu0 %v824
    %967 = vmatprep.subr.mxu0 0.0
    %968 = vmatpush1.msra.mxu0 0.0
    %969 = vmatprep.subr.mxu0 0.0
    %970 = vmatpush1.msra.mxu0 0.0
    %971 = vmatprep.subr.mxu0 0.0
    %972 = vmatpush1.msra.mxu0 0.0
    %973 = vmatprep.subr.mxu0 0.0
    %974 = vmatpush1.msra.mxu0 0.0
    %975 = vmatprep.subr.mxu0 0.0
    %976 = vmatpush1.msra.mxu0 0.0
    %977 = vmatprep.subr.mxu0 0.0
    %978 = vmatpush1.msra.mxu0 0.0
    %979 = vmatprep.subr.mxu0 0.0
    %980 = vmatpush1.msra.mxu0 0.0
    %981 = vmatprep.subr.mxu0 0.0
    %982 = vmatpush1.msra.mxu0 0.0
    %983 = vmatprep.subr.mxu0 0.0
    %984 = vmatpush1.msra.mxu0 0.0
    %985 = vmatprep.subr.mxu0 0.0
    %986 = vmatpush1.msra.mxu0 0.0
    %987 = vmatprep.subr.mxu0 0.0
    %988 = vmatpush1.msra.mxu0 0.0
    %989 = vmatprep.subr.mxu0 0.0
    %990 = vmatpush1.msra.mxu0 0.0
    %991 = vmatprep.subr.mxu0 0.0
    %992 = vmatpush1.msra.mxu0 0.0
    %993 = vmatprep.subr.mxu0 0.0
    %994 = vmatpush1.msra.mxu0 0.0
    %995 = vmatprep.subr.mxu0 0.0
    %996 = vmatpush1.msra.mxu0 0.0
    %997 = vmatprep.subr.mxu0 0.0
    %998 = vmatpush1.msra.mxu0 0.0
    %999 = vmatprep.subr.mxu0 0.0
    %1000 = vmatpush1.msra.mxu0 0.0
    %1001 = vmatprep.subr.mxu0 0.0
    %1002 = vmatpush1.msra.mxu0 0.0
    %1003 = vmatprep.subr.mxu0 0.0
    %1004 = vmatpush1.msra.mxu0 0.0
    %1005 = vmatprep.subr.mxu0 0.0
    %1006 = vmatpush1.msra.mxu0 0.0
    %1007 = vmatprep.subr.mxu0 0.0
    %1008 = vmatpush1.msra.mxu0 0.0
    %1009 = vmatprep.subr.mxu0 0.0
    %1010 = vmatpush1.msra.mxu0 0.0
    %1011 = vmatprep.subr.mxu0 0.0
    %1012 = vmatpush1.msra.mxu0 0.0
    %1013 = vmatprep.subr.mxu0 0.0
    %1014 = vmatpush1.msra.mxu0 0.0
    %1015 = vmatprep.subr.mxu0 0.0
    %1016 = vmatpush1.msra.mxu0 0.0
    %1017 = vmatprep.subr.mxu0 0.0
    %1018 = vmatpush1.msra.mxu0 0.0
    %1019 = vmatprep.subr.mxu0 0.0
    %1020 = vmatpush1.msra.mxu0 0.0
    %1021 = vmatprep.subr.mxu0 0.0
    %1022 = vmatpush1.msra.mxu0 0.0
    %1023 = vmatprep.subr.mxu0 0.0
    %1024 = vmatpush1.msra.mxu0 0.0
    %1025 = vmatprep.subr.mxu0 0.0
    %1026 = vmatpush1.msra.mxu0 0.0
    %1027 = vmatprep.mubr.f32.mxu0 0.0
    %1028 = vmatmul.mubr.f32.gmra.mrb[0].mxu0 %v958
    %v1029 = vpop.f32.mrb[0].mxu0
    %v1030 = vadd.f32 0.0, %v1029
    %v1031 = vpop.f32.mrb[0].mxu0
    %1032 = vmatprep.mubr.f32.mxu0 0.0
    %1033 = vmatmul.mubr.f32.gmra.mrb[0].mxu0 %v961
    %v1034 = vpop.f32.mrb[0].mxu0
    %v1035 = vadd.f32 0.0, %v1034
    %v1036 = vpop.f32.mrb[0].mxu0
    %1037 = vdwg.mxu0
    %1038 = vmatprep.subr.mxu0 0.0
    %1039 = vmatpush1.msra.mxu0 %v949
    %1040 = vmatprep.subr.mxu0 0.0
    %1041 = vmatpush1.msra.mxu0 %v950
    %1042 = vmatprep.subr.mxu0 0.0
    %1043 = vmatpush1.msra.mxu0 0.0
    %1044 = vmatprep.subr.mxu0 0.0
    %1045 = vmatpush1.msra.mxu0 0.0
    %1046 = vmatprep.subr.mxu0 0.0
    %1047 = vmatpush1.msra.mxu0 0.0
    %1048 = vmatprep.subr.mxu0 0.0
    %1049 = vmatpush1.msra.mxu0 0.0
    %1050 = vmatprep.subr.mxu0 0.0
    %1051 = vmatpush1.msra.mxu0 0.0
    %1052 = vmatprep.subr.mxu0 0.0
    %1053 = vmatpush1.msra.mxu0 0.0
    %1054 = vmatprep.subr.mxu0 0.0
    %1055 = vmatpush1.msra.mxu0 0.0
    %1056 = vmatprep.subr.mxu0 0.0
    %1057 = vmatpush1.msra.mxu0 0.0
    %1058 = vmatprep.subr.mxu0 0.0
    %1059 = vmatpush1.msra.mxu0 0.0
    %1060 = vmatprep.subr.mxu0 0.0
    %1061 = vmatpush1.msra.mxu0 0.0
    %1062 = vmatprep.subr.mxu0 0.0
    %1063 = vmatpush1.msra.mxu0 0.0
    %1064 = vmatprep.subr.mxu0 0.0
    %1065 = vmatpush1.msra.mxu0 0.0
    %1066 = vmatprep.subr.mxu0 0.0
    %1067 = vmatpush1.msra.mxu0 0.0
    %1068 = vmatprep.subr.mxu0 0.0
    %1069 = vmatpush1.msra.mxu0 0.0
    %1070 = vmatprep.subr.mxu0 0.0
    %1071 = vmatpush1.msra.mxu0 0.0
    %1072 = vmatprep.subr.mxu0 0.0
    %1073 = vmatpush1.msra.mxu0 0.0
    %1074 = vmatprep.subr.mxu0 0.0
    %1075 = vmatpush1.msra.mxu0 0.0
    %1076 = vmatprep.subr.mxu0 0.0
    %1077 = vmatpush1.msra.mxu0 0.0
    %1078 = vmatprep.subr.mxu0 0.0
    %1079 = vmatpush1.msra.mxu0 0.0
    %1080 = vmatprep.subr.mxu0 0.0
    %1081 = vmatpush1.msra.mxu0 0.0
    %1082 = vmatprep.subr.mxu0 0.0
    %1083 = vmatpush1.msra.mxu0 0.0
    %1084 = vmatprep.subr.mxu0 0.0
    %1085 = vmatpush1.msra.mxu0 0.0
    %1086 = vmatprep.subr.mxu0 0.0
    %1087 = vmatpush1.msra.mxu0 0.0
    %1088 = vmatprep.subr.mxu0 0.0
    %1089 = vmatpush1.msra.mxu0 0.0
    %1090 = vmatprep.subr.mxu0 0.0
    %1091 = vmatpush1.msra.mxu0 0.0
    %1092 = vmatprep.subr.mxu0 0.0
    %1093 = vmatpush1.msra.mxu0 0.0
    %1094 = vmatprep.subr.mxu0 0.0
    %1095 = vmatpush1.msra.mxu0 0.0
    %1096 = vmatprep.subr.mxu0 0.0
    %1097 = vmatpush1.msra.mxu0 0.0
    %1098 = vmatprep.subr.mxu0 0.0
    %1099 = vmatpush1.msra.mxu0 0.0
    %1100 = vmatprep.subr.mxu0 0.0
    %1101 = vmatpush1.msra.mxu0 0.0
    %1102 = vmatprep.mubr.f32.mxu0 0.0
    %1103 = vmatmul.mubr.f32.gmra.mrb[0].mxu0 %v958
    %v1104 = vpop.f32.mrb[0].mxu0
    %v1105 = vadd.f32 0.0, %v1104
    %v1106 = vpop.f32.mrb[0].mxu0
    %1107 = vmatprep.mubr.f32.mxu0 0.0
    %1108 = vmatmul.mubr.f32.gmra.mrb[0].mxu0 %v961
    %v1109 = vpop.f32.mrb[0].mxu0
    %v1110 = vadd.f32 0.0, %v1109
    %v1111 = vpop.f32.mrb[0].mxu0
    %1112 = vdwg.mxu0
    %s1113 = scalar_lea.vmem [#allocation6], 16
    %1114 = vst [vmem:[%s1113] sm:$0xff] %v1030
    %1115 = vst [vmem:[%s1113 + $0x8] sm:$0xff] %v1035
    %s1116 = scalar_lea.vmem [#allocation7], 16
    %1117 = vst [vmem:[%s1116] sm:$0xff] %v1105
    %1118 = vst [vmem:[%s1116 + $0x8] sm:$0xff] %v1110
    %v1119 = vpack.c.bf16 %v1110, %v1105
    %s1120 = scalar_lea.vmem %s5, 64
    %v1121 = vld [vmem:[%s1120] sm:$0xf]
    %v1122 = vld [vmem:[%s1120 + $0x4] sm:$0xf]
    %v1123 = vld [vmem:[%s1120 + $0x8] sm:$0xf]
    %v1124 = vld [vmem:[%s1120 + $0xc] sm:$0xf]
    %v1125 = vld [vmem:[%s1120 + $0x10] sm:$0xf]
    %v1126 = vld [vmem:[%s1120 + $0x14] sm:$0xf]
    %v1127 = vld [vmem:[%s1120 + $0x18] sm:$0xf]
    %v1128 = vld [vmem:[%s1120 + $0x1c] sm:$0xf]
    %v1129 = vld [vmem:[%s1120 + $0x20] sm:$0xf]
    %v1130 = vld [vmem:[%s1120 + $0x24] sm:$0xf]
    %v1131 = vld [vmem:[%s1120 + $0x28] sm:$0xf]
    %v1132 = vld [vmem:[%s1120 + $0x2c] sm:$0xf]
    %v1133 = vld [vmem:[%s1120 + $0x30] sm:$0xf]
    %v1134 = vld [vmem:[%s1120 + $0x34] sm:$0xf]
    %v1135 = vld [vmem:[%s1120 + $0x38] sm:$0xf]
    %v1136 = vld [vmem:[%s1120 + $0x3c] sm:$0xf]
    %s1137 = scalar_lea.vmem %s6, 1
    %v1138 = vld [vmem:[%s1137] sm:$0x1]
    %v1140 = vlaneseq
    %v1141 = vshrl.u32 %v1140, 7
    %v1142 = vsub.s32 0, %v1141
    %v1143 = vrot.slane %v1138, %v1142
    %v1161 = vunpack.c.l.b16 %v1121
    %v1162 = vunpack.c.l.b16 %v1122
    %v1163 = vunpack.c.l.b16 %v1123
    %v1164 = vunpack.c.l.b16 %v1124
    %v1165 = vunpack.c.l.b16 %v1125
    %v1166 = vunpack.c.l.b16 %v1126
    %v1167 = vunpack.c.l.b16 %v1127
    %v1168 = vunpack.c.l.b16 %v1128
    %v1169 = vunpack.c.l.b16 %v1129
    %v1170 = vunpack.c.l.b16 %v1130
    %v1171 = vunpack.c.l.b16 %v1131
    %v1172 = vunpack.c.l.b16 %v1132
    %v1173 = vunpack.c.l.b16 %v1133
    %v1174 = vunpack.c.l.b16 %v1134
    %v1175 = vunpack.c.l.b16 %v1135
    %v1176 = vunpack.c.l.b16 %v1136
    %v1177 = vpack.c.b16 %v1162, %v1161
    %v1178 = vpack.c.b16 %v1164, %v1163
    %v1179 = vpack.c.b16 %v1166, %v1165
    %v1180 = vpack.c.b16 %v1168, %v1167
    %v1181 = vpack.c.b16 %v1170, %v1169
    %v1182 = vpack.c.b16 %v1172, %v1171
    %v1183 = vpack.c.b16 %v1174, %v1173
    %v1184 = vpack.c.b16 %v1176, %v1175
    %1193 = vmatprep.subr.bf16.mxu0 0
    %1194 = vmatpush1.bf16.msra.mxu0 %v1177
    %1195 = vmatprep.subr.bf16.mxu0 0
    %1196 = vmatpush1.bf16.msra.mxu0 %v1178
    %1197 = vmatprep.subr.bf16.mxu0 0
    %1198 = vmatpush1.bf16.msra.mxu0 %v1179
    %1199 = vmatprep.subr.bf16.mxu0 0
    %1200 = vmatpush1.bf16.msra.mxu0 %v1180
    %1201 = vmatprep.subr.bf16.mxu0 0
    %1202 = vmatpush1.bf16.msra.mxu0 %v1181
    %1203 = vmatprep.subr.bf16.mxu0 0
    %1204 = vmatpush1.bf16.msra.mxu0 %v1182
    %1205 = vmatprep.subr.bf16.mxu0 0
    %1206 = vmatpush1.bf16.msra.mxu0 %v1183
    %1207 = vmatprep.subr.bf16.mxu0 0
    %1208 = vmatpush1.bf16.msra.mxu0 %v1184
    %1209 = vmatprep.subr.bf16.mxu0 0
    %1210 = vmatpush1.bf16.msra.mxu0 0
    %1211 = vmatprep.subr.bf16.mxu0 0
    %1212 = vmatpush1.bf16.msra.mxu0 0
    %1213 = vmatprep.subr.bf16.mxu0 0
    %1214 = vmatpush1.bf16.msra.mxu0 0
    %1215 = vmatprep.subr.bf16.mxu0 0
    %1216 = vmatpush1.bf16.msra.mxu0 0
    %1217 = vmatprep.subr.bf16.mxu0 0
    %1218 = vmatpush1.bf16.msra.mxu0 0
    %1219 = vmatprep.subr.bf16.mxu0 0
    %1220 = vmatpush1.bf16.msra.mxu0 0
    %1221 = vmatprep.subr.bf16.mxu0 0
    %1222 = vmatpush1.bf16.msra.mxu0 0
    %1223 = vmatprep.subr.bf16.mxu0 0
    %1224 = vmatpush1.bf16.msra.mxu0 0
    %1225 = vmatprep.mubr.bf16.mxu0 0
    %1226 = vmatmul.mubr.bf16.gmra.mrb[0].mxu0 %v1119
    %v1227 = vpop.f32.mrb[0].mxu0
    %v1228 = vadd.f32 %v1143, %v1227
    %v1229 = vpop.f32.mrb[0].mxu0
    %v1230 = vpop.f32.mrb[0].mxu0
    %v1231 = vadd.f32 %v1143, %v1230
    %v1232 = vpop.f32.mrb[0].mxu0
    %1233 = vdwg.mxu0
    %v1234 = vmul.f32 %v1228, 0.5
    %v1235 = vmul.f32 %v1231, 0.5
    %v1236 = vtanh.pop %v1234
    %v1237 = vtanh.pop %v1235
    %v1238 = vmul.f32 %v1236, 0.5
    %v1239 = vmul.f32 %v1237, 0.5
    %v1240 = vadd.f32 %v1238, 0.5
    %v1241 = vadd.f32 %v1239, 0.5
    %v1242 = vpack.c.bf16 %v1241, %v1240
    %s1243 = scalar_lea.vmem %s7, 64
    %v1244 = vld [vmem:[%s1243] sm:$0xf]
    %v1245 = vld [vmem:[%s1243 + $0x4] sm:$0xf]
    %v1246 = vld [vmem:[%s1243 + $0x8] sm:$0xf]
    %v1247 = vld [vmem:[%s1243 + $0xc] sm:$0xf]
    %v1248 = vld [vmem:[%s1243 + $0x10] sm:$0xf]
    %v1249 = vld [vmem:[%s1243 + $0x14] sm:$0xf]
    %v1250 = vld [vmem:[%s1243 + $0x18] sm:$0xf]
    %v1251 = vld [vmem:[%s1243 + $0x1c] sm:$0xf]
    %v1252 = vld [vmem:[%s1243 + $0x20] sm:$0xf]
    %v1253 = vld [vmem:[%s1243 + $0x24] sm:$0xf]
    %v1254 = vld [vmem:[%s1243 + $0x28] sm:$0xf]
    %v1255 = vld [vmem:[%s1243 + $0x2c] sm:$0xf]
    %v1256 = vld [vmem:[%s1243 + $0x30] sm:$0xf]
    %v1257 = vld [vmem:[%s1243 + $0x34] sm:$0xf]
    %v1258 = vld [vmem:[%s1243 + $0x38] sm:$0xf]
    %v1259 = vld [vmem:[%s1243 + $0x3c] sm:$0xf]
    %s1260 = scalar_lea.vmem %s8, 1
    %v1261 = vld [vmem:[%s1260] sm:$0x1]
    %v1263 = vlaneseq
    %v1264 = vshrl.u32 %v1263, 7
    %v1265 = vsub.s32 0, %v1264
    %v1266 = vrot.slane %v1261, %v1265
    %v1284 = vunpack.c.l.b16 %v1244
    %v1285 = vunpack.c.l.b16 %v1245
    %v1286 = vunpack.c.l.b16 %v1246
    %v1287 = vunpack.c.l.b16 %v1247
    %v1288 = vunpack.c.l.b16 %v1248
    %v1289 = vunpack.c.l.b16 %v1249
    %v1290 = vunpack.c.l.b16 %v1250
    %v1291 = vunpack.c.l.b16 %v1251
    %v1292 = vunpack.c.l.b16 %v1252
    %v1293 = vunpack.c.l.b16 %v1253
    %v1294 = vunpack.c.l.b16 %v1254
    %v1295 = vunpack.c.l.b16 %v1255
    %v1296 = vunpack.c.l.b16 %v1256
    %v1297 = vunpack.c.l.b16 %v1257
    %v1298 = vunpack.c.l.b16 %v1258
    %v1299 = vunpack.c.l.b16 %v1259
    %v1300 = vpack.c.b16 %v1285, %v1284
    %v1301 = vpack.c.b16 %v1287, %v1286
    %v1302 = vpack.c.b16 %v1289, %v1288
    %v1303 = vpack.c.b16 %v1291, %v1290
    %v1304 = vpack.c.b16 %v1293, %v1292
    %v1305 = vpack.c.b16 %v1295, %v1294
    %v1306 = vpack.c.b16 %v1297, %v1296
    %v1307 = vpack.c.b16 %v1299, %v1298
    %1316 = vmatprep.subr.bf16.mxu0 0
    %1317 = vmatpush1.bf16.msra.mxu0 %v1300
    %1318 = vmatprep.subr.bf16.mxu0 0
    %1319 = vmatpush1.bf16.msra.mxu0 %v1301
    %1320 = vmatprep.subr.bf16.mxu0 0
    %1321 = vmatpush1.bf16.msra.mxu0 %v1302
    %1322 = vmatprep.subr.bf16.mxu0 0
    %1323 = vmatpush1.bf16.msra.mxu0 %v1303
    %1324 = vmatprep.subr.bf16.mxu0 0
    %1325 = vmatpush1.bf16.msra.mxu0 %v1304
    %1326 = vmatprep.subr.bf16.mxu0 0
    %1327 = vmatpush1.bf16.msra.mxu0 %v1305
    %1328 = vmatprep.subr.bf16.mxu0 0
    %1329 = vmatpush1.bf16.msra.mxu0 %v1306
    %1330 = vmatprep.subr.bf16.mxu0 0
    %1331 = vmatpush1.bf16.msra.mxu0 %v1307
    %1332 = vmatprep.subr.bf16.mxu0 0
    %1333 = vmatpush1.bf16.msra.mxu0 0
    %1334 = vmatprep.subr.bf16.mxu0 0
    %1335 = vmatpush1.bf16.msra.mxu0 0
    %1336 = vmatprep.subr.bf16.mxu0 0
    %1337 = vmatpush1.bf16.msra.mxu0 0
    %1338 = vmatprep.subr.bf16.mxu0 0
    %1339 = vmatpush1.bf16.msra.mxu0 0
    %1340 = vmatprep.subr.bf16.mxu0 0
    %1341 = vmatpush1.bf16.msra.mxu0 0
    %1342 = vmatprep.subr.bf16.mxu0 0
    %1343 = vmatpush1.bf16.msra.mxu0 0
    %1344 = vmatprep.subr.bf16.mxu0 0
    %1345 = vmatpush1.bf16.msra.mxu0 0
    %1346 = vmatprep.subr.bf16.mxu0 0
    %1347 = vmatpush1.bf16.msra.mxu0 0
    %1348 = vmatprep.mubr.bf16.mxu0 0
    %1349 = vmatmul.mubr.bf16.gmra.mrb[0].mxu0 %v1242
    %v1350 = vpop.f32.mrb[0].mxu0
    %v1351 = vadd.f32 %v1266, %v1350
    %v1352 = vpop.f32.mrb[0].mxu0
    %v1353 = vpop.f32.mrb[0].mxu0
    %v1354 = vadd.f32 %v1266, %v1353
    %v1355 = vpop.f32.mrb[0].mxu0
    %1356 = vdwg.mxu0
    %v1357 = vmul.f32 %v1351, 0.5
    %v1358 = vmul.f32 %v1354, 0.5
    %v1359 = vtanh.pop %v1357
    %v1360 = vtanh.pop %v1358
    %v1361 = vmul.f32 %v1359, 0.5
    %v1362 = vmul.f32 %v1360, 0.5
    %v1363 = vadd.f32 %v1361, 0.5
    %v1364 = vadd.f32 %v1362, 0.5
    %s1365 = scalar_lea.vmem %s14, 16
    %1366 = vst [vmem:[%s1365] sm:$0xff] %v1363
    %1367 = vst [vmem:[%s1365 + $0x8] sm:$0xff] %v1364
    %s1368 = scalar_lea.vmem %s0, 32
    %v1369 = vld [vmem:[%s1368] sm:$0xff]
    %v1370 = vld [vmem:[%s1368 + $0x8] sm:$0xff]
    %v1371 = vpack.c.bf16 %v1370, %v1369
    %s1372 = scalar_lea.vmem %s1, 128
    %v1373 = vld [vmem:[%s1372] sm:$0xf]
    %v1374 = vld [vmem:[%s1372 + $0x4] sm:$0xf]
    %v1375 = vld [vmem:[%s1372 + $0x8] sm:$0xf]
    %v1376 = vld [vmem:[%s1372 + $0xc] sm:$0xf]
    %v1377 = vld [vmem:[%s1372 + $0x10] sm:$0xf]
    %v1378 = vld [vmem:[%s1372 + $0x14] sm:$0xf]
    %v1379 = vld [vmem:[%s1372 + $0x18] sm:$0xf]
    %v1380 = vld [vmem:[%s1372 + $0x1c] sm:$0xf]
    %v1381 = vld [vmem:[%s1372 + $0x20] sm:$0xf]
    %v1382 = vld [vmem:[%s1372 + $0x24] sm:$0xf]
    %v1383 = vld [vmem:[%s1372 + $0x28] sm:$0xf]
    %v1384 = vld [vmem:[%s1372 + $0x2c] sm:$0xf]
    %v1385 = vld [vmem:[%s1372 + $0x30] sm:$0xf]
    %v1386 = vld [vmem:[%s1372 + $0x34] sm:$0xf]
    %v1387 = vld [vmem:[%s1372 + $0x38] sm:$0xf]
    %v1388 = vld [vmem:[%s1372 + $0x3c] sm:$0xf]
    %s1389 = scalar_lea.vmem %s2, 2
    %v1390 = vld [vmem:[%s1389] sm:$0x1]
    %v1392 = vlaneseq
    %v1393 = vshrl.u32 %v1392, 7
    %v1394 = vsub.s32 0, %v1393
    %v1395 = vrot.slane %v1390, %v1394
    %v1413 = vunpack.c.l.b16 %v1373
    %v1414 = vunpack.c.l.b16 %v1374
    %v1415 = vunpack.c.l.b16 %v1375
    %v1416 = vunpack.c.l.b16 %v1376
    %v1417 = vunpack.c.l.b16 %v1377
    %v1418 = vunpack.c.l.b16 %v1378
    %v1419 = vunpack.c.l.b16 %v1379
    %v1420 = vunpack.c.l.b16 %v1380
    %v1421 = vunpack.c.l.b16 %v1381
    %v1422 = vunpack.c.l.b16 %v1382
    %v1423 = vunpack.c.l.b16 %v1383
    %v1424 = vunpack.c.l.b16 %v1384
    %v1425 = vunpack.c.l.b16 %v1385
    %v1426 = vunpack.c.l.b16 %v1386
    %v1427 = vunpack.c.l.b16 %v1387
    %v1428 = vunpack.c.l.b16 %v1388
    %v1429 = vpack.c.b16 %v1414, %v1413
    %v1430 = vpack.c.b16 %v1416, %v1415
    %v1431 = vpack.c.b16 %v1418, %v1417
    %v1432 = vpack.c.b16 %v1420, %v1419
    %v1433 = vpack.c.b16 %v1422, %v1421
    %v1434 = vpack.c.b16 %v1424, %v1423
    %v1435 = vpack.c.b16 %v1426, %v1425
    %v1436 = vpack.c.b16 %v1428, %v1427
    %1445 = vmatprep.subr.bf16.mxu0 0
    %1446 = vmatpush1.bf16.msra.mxu0 %v1429
    %1447 = vmatprep.subr.bf16.mxu0 0
    %1448 = vmatpush1.bf16.msra.mxu0 %v1430
    %1449 = vmatprep.subr.bf16.mxu0 0
    %1450 = vmatpush1.bf16.msra.mxu0 %v1431
    %1451 = vmatprep.subr.bf16.mxu0 0
    %1452 = vmatpush1.bf16.msra.mxu0 %v1432
    %1453 = vmatprep.subr.bf16.mxu0 0
    %1454 = vmatpush1.bf16.msra.mxu0 %v1433
    %1455 = vmatprep.subr.bf16.mxu0 0
    %1456 = vmatpush1.bf16.msra.mxu0 %v1434
    %1457 = vmatprep.subr.bf16.mxu0 0
    %1458 = vmatpush1.bf16.msra.mxu0 %v1435
    %1459 = vmatprep.subr.bf16.mxu0 0
    %1460 = vmatpush1.bf16.msra.mxu0 %v1436
    %1461 = vmatprep.subr.bf16.mxu0 0
    %1462 = vmatpush1.bf16.msra.mxu0 0
    %1463 = vmatprep.subr.bf16.mxu0 0
    %1464 = vmatpush1.bf16.msra.mxu0 0
    %1465 = vmatprep.subr.bf16.mxu0 0
    %1466 = vmatpush1.bf16.msra.mxu0 0
    %1467 = vmatprep.subr.bf16.mxu0 0
    %1468 = vmatpush1.bf16.msra.mxu0 0
    %1469 = vmatprep.subr.bf16.mxu0 0
    %1470 = vmatpush1.bf16.msra.mxu0 0
    %1471 = vmatprep.subr.bf16.mxu0 0
    %1472 = vmatpush1.bf16.msra.mxu0 0
    %1473 = vmatprep.subr.bf16.mxu0 0
    %1474 = vmatpush1.bf16.msra.mxu0 0
    %1475 = vmatprep.subr.bf16.mxu0 0
    %1476 = vmatpush1.bf16.msra.mxu0 0
    %1477 = vmatprep.mubr.bf16.mxu0 0
    %1478 = vmatmul.mubr.bf16.gmra.mrb[0].mxu0 %v1371
    %v1479 = vpop.f32.mrb[0].mxu0
    %v1480 = vadd.f32 %v1395, %v1479
    %v1481 = vpop.f32.mrb[0].mxu0
    %v1482 = vpop.f32.mrb[0].mxu0
    %v1483 = vadd.f32 %v1395, %v1482
    %v1484 = vpop.f32.mrb[0].mxu0
    %1485 = vdwg.mxu0
    %v1486 = vmul.f32 %v1480, 0.5
    %v1487 = vmul.f32 %v1483, 0.5
    %v1488 = vtanh.pop %v1486
    %v1489 = vtanh.pop %v1487
    %v1490 = vmul.f32 %v1488, 0.5
    %v1491 = vmul.f32 %v1489, 0.5
    %v1492 = vadd.f32 %v1490, 0.5
    %v1493 = vadd.f32 %v1491, 0.5
    %s1494 = scalar_lea.vmem [#allocation2], 32
    %1495 = vst [vmem:[%s1494] sm:$0xff] %v1492
    %1496 = vst [vmem:[%s1494 + $0x8] sm:$0xff] %v1493
    %v1497 = vpack.c.bf16 %v1493, %v1492
    %s1498 = scalar_lea.vmem %s3, 128
    %v1499 = vld [vmem:[%s1498] sm:$0xf]
    %v1500 = vld [vmem:[%s1498 + $0x4] sm:$0xf]
    %v1501 = vld [vmem:[%s1498 + $0x8] sm:$0xf]
    %v1502 = vld [vmem:[%s1498 + $0xc] sm:$0xf]
    %v1503 = vld [vmem:[%s1498 + $0x10] sm:$0xf]
    %v1504 = vld [vmem:[%s1498 + $0x14] sm:$0xf]
    %v1505 = vld [vmem:[%s1498 + $0x18] sm:$0xf]
    %v1506 = vld [vmem:[%s1498 + $0x1c] sm:$0xf]
    %v1507 = vld [vmem:[%s1498 + $0x20] sm:$0xf]
    %v1508 = vld [vmem:[%s1498 + $0x24] sm:$0xf]
    %v1509 = vld [vmem:[%s1498 + $0x28] sm:$0xf]
    %v1510 = vld [vmem:[%s1498 + $0x2c] sm:$0xf]
    %v1511 = vld [vmem:[%s1498 + $0x30] sm:$0xf]
    %v1512 = vld [vmem:[%s1498 + $0x34] sm:$0xf]
    %v1513 = vld [vmem:[%s1498 + $0x38] sm:$0xf]
    %v1514 = vld [vmem:[%s1498 + $0x3c] sm:$0xf]
    %s1515 = scalar_lea.vmem %s4, 2
    %v1516 = vld [vmem:[%s1515] sm:$0x1]
    %v1518 = vlaneseq
    %v1519 = vshrl.u32 %v1518, 7
    %v1520 = vsub.s32 0, %v1519
    %v1521 = vrot.slane %v1516, %v1520
    %v1539 = vunpack.c.l.b16 %v1499
    %v1540 = vunpack.c.l.b16 %v1500
    %v1541 = vunpack.c.l.b16 %v1501
    %v1542 = vunpack.c.l.b16 %v1502
    %v1543 = vunpack.c.l.b16 %v1503
    %v1544 = vunpack.c.l.b16 %v1504
    %v1545 = vunpack.c.l.b16 %v1505
    %v1546 = vunpack.c.l.b16 %v1506
    %v1547 = vunpack.c.l.b16 %v1507
    %v1548 = vunpack.c.l.b16 %v1508
    %v1549 = vunpack.c.l.b16 %v1509
    %v1550 = vunpack.c.l.b16 %v1510
    %v1551 = vunpack.c.l.b16 %v1511
    %v1552 = vunpack.c.l.b16 %v1512
    %v1553 = vunpack.c.l.b16 %v1513
    %v1554 = vunpack.c.l.b16 %v1514
    %v1555 = vpack.c.b16 %v1540, %v1539
    %v1556 = vpack.c.b16 %v1542, %v1541
    %v1557 = vpack.c.b16 %v1544, %v1543
    %v1558 = vpack.c.b16 %v1546, %v1545
    %v1559 = vpack.c.b16 %v1548, %v1547
    %v1560 = vpack.c.b16 %v1550, %v1549
    %v1561 = vpack.c.b16 %v1552, %v1551
    %v1562 = vpack.c.b16 %v1554, %v1553
    %1571 = vmatprep.subr.bf16.mxu0 0
    %1572 = vmatpush1.bf16.msra.mxu0 %v1555
    %1573 = vmatprep.subr.bf16.mxu0 0
    %1574 = vmatpush1.bf16.msra.mxu0 %v1556
    %1575 = vmatprep.subr.bf16.mxu0 0
    %1576 = vmatpush1.bf16.msra.mxu0 %v1557
    %1577 = vmatprep.subr.bf16.mxu0 0
    %1578 = vmatpush1.bf16.msra.mxu0 %v1558
    %1579 = vmatprep.subr.bf16.mxu0 0
    %1580 = vmatpush1.bf16.msra.mxu0 %v1559
    %1581 = vmatprep.subr.bf16.mxu0 0
    %1582 = vmatpush1.bf16.msra.mxu0 %v1560
    %1583 = vmatprep.subr.bf16.mxu0 0
    %1584 = vmatpush1.bf16.msra.mxu0 %v1561
    %1585 = vmatprep.subr.bf16.mxu0 0
    %1586 = vmatpush1.bf16.msra.mxu0 %v1562
    %1587 = vmatprep.subr.bf16.mxu0 0
    %1588 = vmatpush1.bf16.msra.mxu0 0
    %1589 = vmatprep.subr.bf16.mxu0 0
    %1590 = vmatpush1.bf16.msra.mxu0 0
    %1591 = vmatprep.subr.bf16.mxu0 0
    %1592 = vmatpush1.bf16.msra.mxu0 0
    %1593 = vmatprep.subr.bf16.mxu0 0
    %1594 = vmatpush1.bf16.msra.mxu0 0
    %1595 = vmatprep.subr.bf16.mxu0 0
    %1596 = vmatpush1.bf16.msra.mxu0 0
    %1597 = vmatprep.subr.bf16.mxu0 0
    %1598 = vmatpush1.bf16.msra.mxu0 0
    %1599 = vmatprep.subr.bf16.mxu0 0
    %1600 = vmatpush1.bf16.msra.mxu0 0
    %1601 = vmatprep.subr.bf16.mxu0 0
    %1602 = vmatpush1.bf16.msra.mxu0 0
    %1603 = vmatprep.mubr.bf16.mxu0 0
    %1604 = vmatmul.mubr.bf16.gmra.mrb[0].mxu0 %v1497
    %v1605 = vpop.f32.mrb[0].mxu0
    %v1606 = vadd.f32 %v1521, %v1605
    %v1607 = vpop.f32.mrb[0].mxu0
    %v1608 = vpop.f32.mrb[0].mxu0
    %v1609 = vadd.f32 %v1521, %v1608
    %v1610 = vpop.f32.mrb[0].mxu0
    %1611 = vdwg.mxu0
    %v1612 = vmul.f32 %v1606, 0.5
    %v1613 = vmul.f32 %v1609, 0.5
    %v1614 = vtanh.pop %v1612
    %v1615 = vtanh.pop %v1613
    %v1616 = vmul.f32 %v1614, 0.5
    %v1617 = vmul.f32 %v1615, 0.5
    %v1618 = vadd.f32 %v1616, 0.5
    %v1619 = vadd.f32 %v1617, 0.5
    %s1620 = scalar_lea.vmem [#allocation4], 32
    %1621 = vst [vmem:[%s1620] sm:$0xff] %v1618
    %1622 = vst [vmem:[%s1620 + $0x8] sm:$0xff] %v1619
    %s1623 = scalar_lea.vmem %s9, 32
    %v1624 = vld [vmem:[%s1623] sm:$0xff]
    %v1625 = vld [vmem:[%s1623 + $0x8] sm:$0xff]
    %v1627 = vsel %vm294, %v1624, 0
    %v1630 = vsel %vm294, %v1625, 0
    %1632 = vmatprep.subr.mxu0 0.0
    %1633 = vmatpush1.msra.mxu0 %v1492
    %1634 = vmatprep.subr.mxu0 0.0
    %1635 = vmatpush1.msra.mxu0 %v1493
    %1636 = vmatprep.subr.mxu0 0.0
    %1637 = vmatpush1.msra.mxu0 0.0
    %1638 = vmatprep.subr.mxu0 0.0
    %1639 = vmatpush1.msra.mxu0 0.0
    %1640 = vmatprep.subr.mxu0 0.0
    %1641 = vmatpush1.msra.mxu0 0.0
    %1642 = vmatprep.subr.mxu0 0.0
    %1643 = vmatpush1.msra.mxu0 0.0
    %1644 = vmatprep.subr.mxu0 0.0
    %1645 = vmatpush1.msra.mxu0 0.0
    %1646 = vmatprep.subr.mxu0 0.0
    %1647 = vmatpush1.msra.mxu0 0.0
    %1648 = vmatprep.subr.mxu0 0.0
    %1649 = vmatpush1.msra.mxu0 0.0
    %1650 = vmatprep.subr.mxu0 0.0
    %1651 = vmatpush1.msra.mxu0 0.0
    %1652 = vmatprep.subr.mxu0 0.0
    %1653 = vmatpush1.msra.mxu0 0.0
    %1654 = vmatprep.subr.mxu0 0.0
    %1655 = vmatpush1.msra.mxu0 0.0
    %1656 = vmatprep.subr.mxu0 0.0
    %1657 = vmatpush1.msra.mxu0 0.0
    %1658 = vmatprep.subr.mxu0 0.0
    %1659 = vmatpush1.msra.mxu0 0.0
    %1660 = vmatprep.subr.mxu0 0.0
    %1661 = vmatpush1.msra.mxu0 0.0
    %1662 = vmatprep.subr.mxu0 0.0
    %1663 = vmatpush1.msra.mxu0 0.0
    %1664 = vmatprep.subr.mxu0 0.0
    %1665 = vmatpush1.msra.mxu0 0.0
    %1666 = vmatprep.subr.mxu0 0.0
    %1667 = vmatpush1.msra.mxu0 0.0
    %1668 = vmatprep.subr.mxu0 0.0
    %1669 = vmatpush1.msra.mxu0 0.0
    %1670 = vmatprep.subr.mxu0 0.0
    %1671 = vmatpush1.msra.mxu0 0.0
    %1672 = vmatprep.subr.mxu0 0.0
    %1673 = vmatpush1.msra.mxu0 0.0
    %1674 = vmatprep.subr.mxu0 0.0
    %1675 = vmatpush1.msra.mxu0 0.0
    %1676 = vmatprep.subr.mxu0 0.0
    %1677 = vmatpush1.msra.mxu0 0.0
    %1678 = vmatprep.subr.mxu0 0.0
    %1679 = vmatpush1.msra.mxu0 0.0
    %1680 = vmatprep.subr.mxu0 0.0
    %1681 = vmatpush1.msra.mxu0 0.0
    %1682 = vmatprep.subr.mxu0 0.0
    %1683 = vmatpush1.msra.mxu0 0.0
    %1684 = vmatprep.subr.mxu0 0.0
    %1685 = vmatpush1.msra.mxu0 0.0
    %1686 = vmatprep.subr.mxu0 0.0
    %1687 = vmatpush1.msra.mxu0 0.0
    %1688 = vmatprep.subr.mxu0 0.0
    %1689 = vmatpush1.msra.mxu0 0.0
    %1690 = vmatprep.subr.mxu0 0.0
    %1691 = vmatpush1.msra.mxu0 0.0
    %1692 = vmatprep.subr.mxu0 0.0
    %1693 = vmatpush1.msra.mxu0 0.0
    %1694 = vmatprep.subr.mxu0 0.0
    %1695 = vmatpush1.msra.mxu0 0.0
    %1696 = vmatprep.mubr.f32.mxu0 0.0
    %1697 = vmatmul.mubr.f32.gmra.mrb[0].mxu0 %v1627
    %v1698 = vpop.f32.mrb[0].mxu0
    %v1699 = vadd.f32 0.0, %v1698
    %v1700 = vpop.f32.mrb[0].mxu0
    %1701 = vmatprep.mubr.f32.mxu0 0.0
    %1702 = vmatmul.mubr.f32.gmra.mrb[0].mxu0 %v1630
    %v1703 = vpop.f32.mrb[0].mxu0
    %v1704 = vadd.f32 0.0, %v1703
    %v1705 = vpop.f32.mrb[0].mxu0
    %1706 = vdwg.mxu0
    %1707 = vmatprep.subr.mxu0 0.0
    %1708 = vmatpush1.msra.mxu0 %v1618
    %1709 = vmatprep.subr.mxu0 0.0
    %1710 = vmatpush1.msra.mxu0 %v1619
    %1711 = vmatprep.subr.mxu0 0.0
    %1712 = vmatpush1.msra.mxu0 0.0
    %1713 = vmatprep.subr.mxu0 0.0
    %1714 = vmatpush1.msra.mxu0 0.0
    %1715 = vmatprep.subr.mxu0 0.0
    %1716 = vmatpush1.msra.mxu0 0.0
    %1717 = vmatprep.subr.mxu0 0.0
    %1718 = vmatpush1.msra.mxu0 0.0
    %1719 = vmatprep.subr.mxu0 0.0
    %1720 = vmatpush1.msra.mxu0 0.0
    %1721 = vmatprep.subr.mxu0 0.0
    %1722 = vmatpush1.msra.mxu0 0.0
    %1723 = vmatprep.subr.mxu0 0.0
    %1724 = vmatpush1.msra.mxu0 0.0
    %1725 = vmatprep.subr.mxu0 0.0
    %1726 = vmatpush1.msra.mxu0 0.0
    %1727 = vmatprep.subr.mxu0 0.0
    %1728 = vmatpush1.msra.mxu0 0.0
    %1729 = vmatprep.subr.mxu0 0.0
    %1730 = vmatpush1.msra.mxu0 0.0
    %1731 = vmatprep.subr.mxu0 0.0
    %1732 = vmatpush1.msra.mxu0 0.0
    %1733 = vmatprep.subr.mxu0 0.0
    %1734 = vmatpush1.msra.mxu0 0.0
    %1735 = vmatprep.subr.mxu0 0.0
    %1736 = vmatpush1.msra.mxu0 0.0
    %1737 = vmatprep.subr.mxu0 0.0
    %1738 = vmatpush1.msra.mxu0 0.0
    %1739 = vmatprep.subr.mxu0 0.0
    %1740 = vmatpush1.msra.mxu0 0.0
    %1741 = vmatprep.subr.mxu0 0.0
    %1742 = vmatpush1.msra.mxu0 0.0
    %1743 = vmatprep.subr.mxu0 0.0
    %1744 = vmatpush1.msra.mxu0 0.0
    %1745 = vmatprep.subr.mxu0 0.0
    %1746 = vmatpush1.msra.mxu0 0.0
    %1747 = vmatprep.subr.mxu0 0.0
    %1748 = vmatpush1.msra.mxu0 0.0
    %1749 = vmatprep.subr.mxu0 0.0
    %1750 = vmatpush1.msra.mxu0 0.0
    %1751 = vmatprep.subr.mxu0 0.0
    %1752 = vmatpush1.msra.mxu0 0.0
    %1753 = vmatprep.subr.mxu0 0.0
    %1754 = vmatpush1.msra.mxu0 0.0
    %1755 = vmatprep.subr.mxu0 0.0
    %1756 = vmatpush1.msra.mxu0 0.0
    %1757 = vmatprep.subr.mxu0 0.0
    %1758 = vmatpush1.msra.mxu0 0.0
    %1759 = vmatprep.subr.mxu0 0.0
    %1760 = vmatpush1.msra.mxu0 0.0
    %1761 = vmatprep.subr.mxu0 0.0
    %1762 = vmatpush1.msra.mxu0 0.0
    %1763 = vmatprep.subr.mxu0 0.0
    %1764 = vmatpush1.msra.mxu0 0.0
    %1765 = vmatprep.subr.mxu0 0.0
    %1766 = vmatpush1.msra.mxu0 0.0
    %1767 = vmatprep.subr.mxu0 0.0
    %1768 = vmatpush1.msra.mxu0 0.0
    %1769 = vmatprep.subr.mxu0 0.0
    %1770 = vmatpush1.msra.mxu0 0.0
    %1771 = vmatprep.mubr.f32.mxu0 0.0
    %1772 = vmatmul.mubr.f32.gmra.mrb[0].mxu0 %v1627
    %v1773 = vpop.f32.mrb[0].mxu0
    %v1774 = vadd.f32 0.0, %v1773
    %v1775 = vpop.f32.mrb[0].mxu0
    %1776 = vmatprep.mubr.f32.mxu0 0.0
    %1777 = vmatmul.mubr.f32.gmra.mrb[0].mxu0 %v1630
    %v1778 = vpop.f32.mrb[0].mxu0
    %v1779 = vadd.f32 0.0, %v1778
    %v1780 = vpop.f32.mrb[0].mxu0
    %1781 = vdwg.mxu0
    %s1782 = scalar_lea.vmem [#allocation6], 32
    %1783 = vst [vmem:[%s1782] sm:$0xff] %v1699
    %1784 = vst [vmem:[%s1782 + $0x8] sm:$0xff] %v1704
    %s1785 = scalar_lea.vmem [#allocation7], 32
    %1786 = vst [vmem:[%s1785] sm:$0xff] %v1774
    %1787 = vst [vmem:[%s1785 + $0x8] sm:$0xff] %v1779
    %v1788 = vpack.c.bf16 %v1779, %v1774
    %s1789 = scalar_lea.vmem %s5, 128
    %v1790 = vld [vmem:[%s1789] sm:$0xf]
    %v1791 = vld [vmem:[%s1789 + $0x4] sm:$0xf]
    %v1792 = vld [vmem:[%s1789 + $0x8] sm:$0xf]
    %v1793 = vld [vmem:[%s1789 + $0xc] sm:$0xf]
    %v1794 = vld [vmem:[%s1789 + $0x10] sm:$0xf]
    %v1795 = vld [vmem:[%s1789 + $0x14] sm:$0xf]
    %v1796 = vld [vmem:[%s1789 + $0x18] sm:$0xf]
    %v1797 = vld [vmem:[%s1789 + $0x1c] sm:$0xf]
    %v1798 = vld [vmem:[%s1789 + $0x20] sm:$0xf]
    %v1799 = vld [vmem:[%s1789 + $0x24] sm:$0xf]
    %v1800 = vld [vmem:[%s1789 + $0x28] sm:$0xf]
    %v1801 = vld [vmem:[%s1789 + $0x2c] sm:$0xf]
    %v1802 = vld [vmem:[%s1789 + $0x30] sm:$0xf]
    %v1803 = vld [vmem:[%s1789 + $0x34] sm:$0xf]
    %v1804 = vld [vmem:[%s1789 + $0x38] sm:$0xf]
    %v1805 = vld [vmem:[%s1789 + $0x3c] sm:$0xf]
    %s1806 = scalar_lea.vmem %s6, 2
    %v1807 = vld [vmem:[%s1806] sm:$0x1]
    %v1809 = vlaneseq
    %v1810 = vshrl.u32 %v1809, 7
    %v1811 = vsub.s32 0, %v1810
    %v1812 = vrot.slane %v1807, %v1811
    %v1830 = vunpack.c.l.b16 %v1790
    %v1831 = vunpack.c.l.b16 %v1791
    %v1832 = vunpack.c.l.b16 %v1792
    %v1833 = vunpack.c.l.b16 %v1793
    %v1834 = vunpack.c.l.b16 %v1794
    %v1835 = vunpack.c.l.b16 %v1795
    %v1836 = vunpack.c.l.b16 %v1796
    %v1837 = vunpack.c.l.b16 %v1797
    %v1838 = vunpack.c.l.b16 %v1798
    %v1839 = vunpack.c.l.b16 %v1799
    %v1840 = vunpack.c.l.b16 %v1800
    %v1841 = vunpack.c.l.b16 %v1801
    %v1842 = vunpack.c.l.b16 %v1802
    %v1843 = vunpack.c.l.b16 %v1803
    %v1844 = vunpack.c.l.b16 %v1804
    %v1845 = vunpack.c.l.b16 %v1805
    %v1846 = vpack.c.b16 %v1831, %v1830
    %v1847 = vpack.c.b16 %v1833, %v1832
    %v1848 = vpack.c.b16 %v1835, %v1834
    %v1849 = vpack.c.b16 %v1837, %v1836
    %v1850 = vpack.c.b16 %v1839, %v1838
    %v1851 = vpack.c.b16 %v1841, %v1840
    %v1852 = vpack.c.b16 %v1843, %v1842
    %v1853 = vpack.c.b16 %v1845, %v1844
    %1862 = vmatprep.subr.bf16.mxu0 0
    %1863 = vmatpush1.bf16.msra.mxu0 %v1846
    %1864 = vmatprep.subr.bf16.mxu0 0
    %1865 = vmatpush1.bf16.msra.mxu0 %v1847
    %1866 = vmatprep.subr.bf16.mxu0 0
    %1867 = vmatpush1.bf16.msra.mxu0 %v1848
    %1868 = vmatprep.subr.bf16.mxu0 0
    %1869 = vmatpush1.bf16.msra.mxu0 %v1849
    %1870 = vmatprep.subr.bf16.mxu0 0
    %1871 = vmatpush1.bf16.msra.mxu0 %v1850
    %1872 = vmatprep.subr.bf16.mxu0 0
    %1873 = vmatpush1.bf16.msra.mxu0 %v1851
    %1874 = vmatprep.subr.bf16.mxu0 0
    %1875 = vmatpush1.bf16.msra.mxu0 %v1852
    %1876 = vmatprep.subr.bf16.mxu0 0
    %1877 = vmatpush1.bf16.msra.mxu0 %v1853
    %1878 = vmatprep.subr.bf16.mxu0 0
    %1879 = vmatpush1.bf16.msra.mxu0 0
    %1880 = vmatprep.subr.bf16.mxu0 0
    %1881 = vmatpush1.bf16.msra.mxu0 0
    %1882 = vmatprep.subr.bf16.mxu0 0
    %1883 = vmatpush1.bf16.msra.mxu0 0
    %1884 = vmatprep.subr.bf16.mxu0 0
    %1885 = vmatpush1.bf16.msra.mxu0 0
    %1886 = vmatprep.subr.bf16.mxu0 0
    %1887 = vmatpush1.bf16.msra.mxu0 0
    %1888 = vmatprep.subr.bf16.mxu0 0
    %1889 = vmatpush1.bf16.msra.mxu0 0
    %1890 = vmatprep.subr.bf16.mxu0 0
    %1891 = vmatpush1.bf16.msra.mxu0 0
    %1892 = vmatprep.subr.bf16.mxu0 0
    %1893 = vmatpush1.bf16.msra.mxu0 0
    %1894 = vmatprep.mubr.bf16.mxu0 0
    %1895 = vmatmul.mubr.bf16.gmra.mrb[0].mxu0 %v1788
    %v1896 = vpop.f32.mrb[0].mxu0
    %v1897 = vadd.f32 %v1812, %v1896
    %v1898 = vpop.f32.mrb[0].mxu0
    %v1899 = vpop.f32.mrb[0].mxu0
    %v1900 = vadd.f32 %v1812, %v1899
    %v1901 = vpop.f32.mrb[0].mxu0
    %1902 = vdwg.mxu0
    %v1903 = vmul.f32 %v1897, 0.5
    %v1904 = vmul.f32 %v1900, 0.5
    %v1905 = vtanh.pop %v1903
    %v1906 = vtanh.pop %v1904
    %v1907 = vmul.f32 %v1905, 0.5
    %v1908 = vmul.f32 %v1906, 0.5
    %v1909 = vadd.f32 %v1907, 0.5
    %v1910 = vadd.f32 %v1908, 0.5
    %v1911 = vpack.c.bf16 %v1910, %v1909
    %s1912 = scalar_lea.vmem %s7, 128
    %v1913 = vld [vmem:[%s1912] sm:$0xf]
    %v1914 = vld [vmem:[%s1912 + $0x4] sm:$0xf]
    %v1915 = vld [vmem:[%s1912 + $0x8] sm:$0xf]
    %v1916 = vld [vmem:[%s1912 + $0xc] sm:$0xf]
    %v1917 = vld [vmem:[%s1912 + $0x10] sm:$0xf]
    %v1918 = vld [vmem:[%s1912 + $0x14] sm:$0xf]
    %v1919 = vld [vmem:[%s1912 + $0x18] sm:$0xf]
    %v1920 = vld [vmem:[%s1912 + $0x1c] sm:$0xf]
    %v1921 = vld [vmem:[%s1912 + $0x20] sm:$0xf]
    %v1922 = vld [vmem:[%s1912 + $0x24] sm:$0xf]
    %v1923 = vld [vmem:[%s1912 + $0x28] sm:$0xf]
    %v1924 = vld [vmem:[%s1912 + $0x2c] sm:$0xf]
    %v1925 = vld [vmem:[%s1912 + $0x30] sm:$0xf]
    %v1926 = vld [vmem:[%s1912 + $0x34] sm:$0xf]
    %v1927 = vld [vmem:[%s1912 + $0x38] sm:$0xf]
    %v1928 = vld [vmem:[%s1912 + $0x3c] sm:$0xf]
    %s1929 = scalar_lea.vmem %s8, 2
    %v1930 = vld [vmem:[%s1929] sm:$0x1]
    %v1932 = vlaneseq
    %v1933 = vshrl.u32 %v1932, 7
    %v1934 = vsub.s32 0, %v1933
    %v1935 = vrot.slane %v1930, %v1934
    %v1953 = vunpack.c.l.b16 %v1913
    %v1954 = vunpack.c.l.b16 %v1914
    %v1955 = vunpack.c.l.b16 %v1915
    %v1956 = vunpack.c.l.b16 %v1916
    %v1957 = vunpack.c.l.b16 %v1917
    %v1958 = vunpack.c.l.b16 %v1918
    %v1959 = vunpack.c.l.b16 %v1919
    %v1960 = vunpack.c.l.b16 %v1920
    %v1961 = vunpack.c.l.b16 %v1921
    %v1962 = vunpack.c.l.b16 %v1922
    %v1963 = vunpack.c.l.b16 %v1923
    %v1964 = vunpack.c.l.b16 %v1924
    %v1965 = vunpack.c.l.b16 %v1925
    %v1966 = vunpack.c.l.b16 %v1926
    %v1967 = vunpack.c.l.b16 %v1927
    %v1968 = vunpack.c.l.b16 %v1928
    %v1969 = vpack.c.b16 %v1954, %v1953
    %v1970 = vpack.c.b16 %v1956, %v1955
    %v1971 = vpack.c.b16 %v1958, %v1957
    %v1972 = vpack.c.b16 %v1960, %v1959
    %v1973 = vpack.c.b16 %v1962, %v1961
    %v1974 = vpack.c.b16 %v1964, %v1963
    %v1975 = vpack.c.b16 %v1966, %v1965
    %v1976 = vpack.c.b16 %v1968, %v1967
    %1985 = vmatprep.subr.bf16.mxu0 0
    %1986 = vmatpush1.bf16.msra.mxu0 %v1969
    %1987 = vmatprep.subr.bf16.mxu0 0
    %1988 = vmatpush1.bf16.msra.mxu0 %v1970
    %1989 = vmatprep.subr.bf16.mxu0 0
    %1990 = vmatpush1.bf16.msra.mxu0 %v1971
    %1991 = vmatprep.subr.bf16.mxu0 0
    %1992 = vmatpush1.bf16.msra.mxu0 %v1972
    %1993 = vmatprep.subr.bf16.mxu0 0
    %1994 = vmatpush1.bf16.msra.mxu0 %v1973
    %1995 = vmatprep.subr.bf16.mxu0 0
    %1996 = vmatpush1.bf16.msra.mxu0 %v1974
    %1997 = vmatprep.subr.bf16.mxu0 0
    %1998 = vmatpush1.bf16.msra.mxu0 %v1975
    %1999 = vmatprep.subr.bf16.mxu0 0
    %2000 = vmatpush1.bf16.msra.mxu0 %v1976
    %2001 = vmatprep.subr.bf16.mxu0 0
    %2002 = vmatpush1.bf16.msra.mxu0 0
    %2003 = vmatprep.subr.bf16.mxu0 0
    %2004 = vmatpush1.bf16.msra.mxu0 0
    %2005 = vmatprep.subr.bf16.mxu0 0
    %2006 = vmatpush1.bf16.msra.mxu0 0
    %2007 = vmatprep.subr.bf16.mxu0 0
    %2008 = vmatpush1.bf16.msra.mxu0 0
    %2009 = vmatprep.subr.bf16.mxu0 0
    %2010 = vmatpush1.bf16.msra.mxu0 0
    %2011 = vmatprep.subr.bf16.mxu0 0
    %2012 = vmatpush1.bf16.msra.mxu0 0
    %2013 = vmatprep.subr.bf16.mxu0 0
    %2014 = vmatpush1.bf16.msra.mxu0 0
    %2015 = vmatprep.subr.bf16.mxu0 0
    %2016 = vmatpush1.bf16.msra.mxu0 0
    %2017 = vmatprep.mubr.bf16.mxu0 0
    %2018 = vmatmul.mubr.bf16.gmra.mrb[0].mxu0 %v1911
    %v2019 = vpop.f32.mrb[0].mxu0
    %v2020 = vadd.f32 %v1935, %v2019
    %v2021 = vpop.f32.mrb[0].mxu0
    %v2022 = vpop.f32.mrb[0].mxu0
    %v2023 = vadd.f32 %v1935, %v2022
    %v2024 = vpop.f32.mrb[0].mxu0
    %2025 = vdwg.mxu0
    %v2026 = vmul.f32 %v2020, 0.5
    %v2027 = vmul.f32 %v2023, 0.5
    %v2028 = vtanh.pop %v2026
    %v2029 = vtanh.pop %v2027
    %v2030 = vmul.f32 %v2028, 0.5
    %v2031 = vmul.f32 %v2029, 0.5
    %v2032 = vadd.f32 %v2030, 0.5
    %v2033 = vadd.f32 %v2031, 0.5
    %s2034 = scalar_lea.vmem %s14, 32
    %2035 = vst [vmem:[%s2034] sm:$0xff] %v2032
    %2036 = vst [vmem:[%s2034 + $0x8] sm:$0xff] %v2033
    // Predicated region
    $region42: #{dsrmsc_forward.1} parent=1 // pred_check
      _
    $region43: #{dsrmsc_forward.1} parent=1 // pred_check_branch
      %2038 = sbr.rel (0) target = $region45
    $region44: #{dsrmsc_forward.1} parent=1 // pred_region
      %s2040 = ssub.s32 768, 768
      %2041 = vsyncadd [#allocation3], %s2040
      %s2042 = sshll.u32 [#allocation2], 4
      %s2043 = int_to_ptr.vmem [resolvable:$true] %s2042
      %2048 = dma.vmem_to_hbm [thread:$0]  %s2043, 768, %s10, [#allocation3], 128, 128, 8
    $region45: #{dsrmsc_forward.1} parent=1 // pred_fallthru
      _
    // Predicated region
    $region46: #{dsrmsc_forward.1} parent=1 // pred_check
      _
    $region47: #{dsrmsc_forward.1} parent=1 // pred_check_branch
      %2050 = sbr.rel (0) target = $region49
    $region48: #{dsrmsc_forward.1} parent=1 // pred_region
      %s2052 = ssub.s32 768, 768
      %2053 = vsyncadd [#allocation5], %s2052
      %s2054 = sshll.u32 [#allocation4], 4
      %s2055 = int_to_ptr.vmem [resolvable:$true] %s2054
      %2060 = dma.vmem_to_hbm [thread:$0]  %s2055, 768, %s11, [#allocation5], 128, 128, 8
    $region49: #{dsrmsc_forward.1} parent=1 // pred_fallthru
      _
    // Predicated region
    $region50: #{dsrmsc_forward.1} parent=1 // pred_check
      _
    $region51: #{dsrmsc_forward.1} parent=1 // pred_check_branch
      %2062 = sbr.rel (0) target = $region53
    $region52: #{dsrmsc_forward.1} parent=1 // pred_region
      %s2064 = ssub.s32 768, 768
      %2065 = vsyncadd [#allocation5], %s2064
      %s2066 = sshll.u32 [#allocation6], 4
      %s2067 = int_to_ptr.vmem [resolvable:$true] %s2066
      %2072 = dma.vmem_to_hbm [thread:$0]  %s2067, 768, %s12, [#allocation5], 128, 128, 8
    $region53: #{dsrmsc_forward.1} parent=1 // pred_fallthru
      _
    // Predicated region
    $region54: #{dsrmsc_forward.1} parent=1 // pred_check
      _
    $region55: #{dsrmsc_forward.1} parent=1 // pred_check_branch
      %2074 = sbr.rel (0) target = $region57
    $region56: #{dsrmsc_forward.1} parent=1 // pred_region
      %s2076 = ssub.s32 768, 768
      %2077 = vsyncadd [#allocation8], %s2076
      %s2078 = sshll.u32 [#allocation7], 4
      %s2079 = int_to_ptr.vmem [resolvable:$true] %s2078
      %2084 = dma.vmem_to_hbm [thread:$0]  %s2079, 768, %s13, [#allocation8], 128, 128, 8
    $region57: #{dsrmsc_forward.1} parent=1 // pred_fallthru
      _
    // Predicated region
    $region58: #{dsrmsc_forward.1} parent=1 // pred_check
      _
    $region59: #{dsrmsc_forward.1} parent=1 // pred_check_branch
      %2086 = sbr.rel (0) target = $region61
    $region60: #{dsrmsc_forward.1} parent=1 // pred_region
      _
    $region61: #{dsrmsc_forward.1} parent=1 // pred_fallthru
      _
    // Predicated region
    $region62: #{dsrmsc_forward.1} parent=1 // pred_check
      _
    $region63: #{dsrmsc_forward.1} parent=1 // pred_check_branch
      %2088 = sbr.rel (0) target = $region65
    $region64: #{dsrmsc_forward.1} parent=1 // pred_region
      %2089 = dma.done [#allocation3], 768
    $region65: #{dsrmsc_forward.1} parent=1 // pred_fallthru
      _
    // Predicated region
    $region66: #{dsrmsc_forward.1} parent=1 // pred_check
      _
    $region67: #{dsrmsc_forward.1} parent=1 // pred_check_branch
      %2091 = sbr.rel (0) target = $region69
    $region68: #{dsrmsc_forward.1} parent=1 // pred_region
      %2092 = dma.done [#allocation5], 768
    $region69: #{dsrmsc_forward.1} parent=1 // pred_fallthru
      _
    // Predicated region
    $region70: #{dsrmsc_forward.1} parent=1 // pred_check
      _
    $region71: #{dsrmsc_forward.1} parent=1 // pred_check_branch
      %2094 = sbr.rel (0) target = $region73
    $region72: #{dsrmsc_forward.1} parent=1 // pred_region
      %2095 = dma.done [#allocation5], 768
    $region73: #{dsrmsc_forward.1} parent=1 // pred_fallthru
      _
    // Predicated region
    $region74: #{dsrmsc_forward.1} parent=1 // pred_check
      _
    $region75: #{dsrmsc_forward.1} parent=1 // pred_check_branch
      %2097 = sbr.rel (0) target = $region77
    $region76: #{dsrmsc_forward.1} parent=1 // pred_region
      %2098 = dma.done [#allocation8], 768
    $region77: #{dsrmsc_forward.1} parent=1 // pred_fallthru
      _
    // Predicated region
    $region78: #{dsrmsc_forward.1} parent=1 // pred_check
      _
    $region79: #{dsrmsc_forward.1} parent=1 // pred_check_branch
      %2100 = sbr.rel (0) target = $region81
    $region80: #{dsrmsc_forward.1} parent=1 // pred_region
      _
    $region81: #{dsrmsc_forward.1} parent=1 // pred_fallthru
      _
    %2101 = vsyncpa [#allocation3], 1
    %2102 = vsyncpa [#allocation5], 1
    %2103 = vsyncpa [#allocation8], 1

</llo_original>
